<compile_context>
chip_gen: v7x
topology: tpu7x:2x2x1
jax: 0.10.0
libtpu: 0.0.40
codegen_flags: <defaults>
</compile_context>

<pallas_src>
import math

import jax
import jax.numpy as jnp
from jax.experimental import pallas as pl
from jax.experimental.pallas import tpu as pltpu


# --------------------------------------------------------------------------- #
# Per-generation knobs
# --------------------------------------------------------------------------- #
def _vmem_limit_bytes():
    """~75% of this generation's per-core VMEM (v7x: ~48 MiB, v5e/v6e: ~96 MiB)."""
    try:
        cap = int(pltpu.get_tpu_info().vmem_capacity_bytes)
    except Exception:
        cap = 64 * 1024 * 1024            # conservative (v7x-sized) fallback
    return max(32 * 1024 * 1024, (cap * 3) // 4)


def _compiler_params(num_parallel_axes, vmem_limit):
    return pltpu.CompilerParams(
        dimension_semantics=tuple("parallel" for _ in range(num_parallel_axes)),
        vmem_limit_bytes=int(vmem_limit))


def _pick_m_tile(m, bytes_per_row, budget, target=1024):
    """Largest divisor of m (multiple of 8, or m itself) that is <= target and
    fits the per-step VMEM budget; prefer tiles giving >= 4 grid steps so the
    pipeline double-buffers and both v7x TensorCores get work."""
    cands = [d for d in range(m, 0, -1) if m % d == 0 and (d % 8 == 0 or d == m)]
    fit = [d for d in cands if d <= target and d * bytes_per_row <= budget]
    if not fit:
        return cands[-1]
    for d in fit:
        if d >= 128 and m // d >= 4:
            return d
    return fit[0]


def _pick_row_tile(ho, wo, ws, ss, halo, cin, cout, n, budget):
    """Output-row tile for the 3x3 conv: divisor of ho, <= 1024 rows per step,
    per-step VMEM under budget, prefer >= 4 total grid steps."""
    best = None
    for d in range(ho, 0, -1):
        if ho % d:
            continue
        rows = d * wo
        est = (2 * ss * (d + halo) * ws * cin * 2    # windowed input, double-buffered
               + 2 * rows * cout * 2                 # bf16 output, double-buffered
               + rows * (9 * cin * 2 + cout * 4)     # in-kernel (rows, 9*cin) + f32 epi
               + 2 * 9 * cin * cout * 2)             # weights
        if rows > 1024 or est > budget:
            continue
        if best is None:
            best = d
        if n * (ho // d) >= 4:
            return d
    return best if best is not None else 1


# --------------------------------------------------------------------------- #
# Pallas kernels
# --------------------------------------------------------------------------- #
def _matmul_bn_relu_kernel(x_ref, w_ref, b_ref, o_ref):
    # y = relu(x @ w_folded + shift); bf16 MXU operands, f32 accumulation.
    xv = x_ref[...].astype(jnp.bfloat16)
    y = jnp.dot(xv, w_ref[...], preferred_element_type=jnp.float32)
    y = jnp.maximum(y + b_ref[...], 0.0)
    o_ref[...] = y.astype(o_ref.dtype)


def _conv3_identity_kernel(h_ref, w3_ref, b3_ref, res_ref, o_ref):
    # out = relu(h @ w3_folded + shift3 + residual)   (residual stays f32)
    y = jnp.dot(h_ref[...], w3_ref[...], preferred_element_type=jnp.float32)
    y = y + b3_ref[...] + res_ref[...]
    o_ref[...] = jnp.maximum(y, 0.0).astype(o_ref.dtype)


def _conv3_proj_kernel(h_ref, w3_ref, b3_ref, xs_ref, wsc_ref, bsc_ref, o_ref):
    # out = relu(h @ w3_folded + shift3 + (x_sub @ wsc_folded + shift_sc))
    # Projection shortcut fused on the same resident M tile.
    y = jnp.dot(h_ref[...], w3_ref[...], preferred_element_type=jnp.float32)
    r = jnp.dot(xs_ref[...], wsc_ref[...], preferred_element_type=jnp.float32)
    y = y + b3_ref[...] + r + bsc_ref[...]
    o_ref[...] = jnp.maximum(y, 0.0).astype(o_ref.dtype)


def _make_conv3x3_kernel(th, wo, stride, halo):
    """3x3 conv tile: gather the 9 taps of the VMEM-resident (polyphase) window
    into one (th*wo, 9*cin) tile and run a SINGLE wide-K MXU matmul."""
    def kernel(x_ref, w_ref, b_ref, o_ref):
        win = x_ref[0, 0]                       # (ss, th+halo, ws, cin) bf16
        cin = win.shape[-1]
        taps = []
        for dh in range(3):
            for dw in range(3):
                ph = (dh % stride) * stride + (dw % stride)
                ih, iw = dh // stride, dw // stride
                taps.append(win[ph, ih:ih + th, iw:iw + wo, :])   # (th, wo, cin)
        xt = jnp.concatenate(taps, axis=-1).reshape(th * wo, 9 * cin)
        y = jnp.dot(xt, w_ref[...], preferred_element_type=jnp.float32)
        y = jnp.maximum(y + b_ref[...], 0.0)
        o_ref[0] = y.reshape(th, wo, -1).astype(o_ref.dtype)
    return kernel


# --------------------------------------------------------------------------- #
# Pallas-call wrappers
# --------------------------------------------------------------------------- #
def matmul_bn_relu(x2d, w, shift, out_dtype, vmem_limit):
    m, k = x2d.shape
    n = w.shape[1]
    bpr = (2 * k * x2d.dtype.itemsize
           + 2 * n * jnp.dtype(out_dtype).itemsize
           + n * 4)
    tm = _pick_m_tile(m, bpr, vmem_limit // 2)
    return pl.pallas_call(
        _matmul_bn_relu_kernel,
        out_shape=jax.ShapeDtypeStruct((m, n), out_dtype),
        grid=(m // tm,),
        in_specs=[pl.BlockSpec((tm, k), lambda i: (i, 0)),
                  pl.BlockSpec((k, n), lambda i: (0, 0)),
                  pl.BlockSpec((1, n), lambda i: (0, 0))],
        out_specs=pl.BlockSpec((tm, n), lambda i: (i, 0)),
        compiler_params=_compiler_params(1, vmem_limit),
    )(x2d, w, shift)


def conv3x3_bn_relu(h1_nhwc, w2, shift, stride, vmem_limit):
    """3x3 stride-s conv + BN + ReLU; bf16 in / bf16 out; no im2col blow-up."""
    n, h, w, cin = h1_nhwc.shape
    cout = w2.shape[-1]
    ho = (h - 1) // stride + 1
    wo = (w - 1) // stride + 1
    halo = 2 // stride

    # Pad + polyphase split (for stride==1 this degenerates to a plain pad:
    # the singleton-axis transpose is a free bitcast in XLA).
    xp = _polyphase_pad(h1_nhwc, stride)        # (n, ss, hs, ws, cin), hs >= ho+halo
    ss, ws = xp.shape[1], xp.shape[3]
    th = _pick_row_tile(ho, wo, ws, ss, halo, cin, cout, n, vmem_limit // 2)
    nt = ho // th
    # Overlapping row windows: the 1-2 halo rows per tile are duplicated in
    # this bf16 handoff tensor (~halo/th extra bytes) so every grid step is a
    # plain Blocked block and the pipeline double-buffers.
    win = jnp.stack([xp[:, :, t * th: t * th + th + halo] for t in range(nt)],
                    axis=1)                      # (n, nt, ss, th+halo, ws, cin)

    return pl.pallas_call(
        _make_conv3x3_kernel(th, wo, stride, halo),
        out_shape=jax.ShapeDtypeStruct((n, ho, wo, cout), jnp.bfloat16),
        grid=(n, nt),
        in_specs=[pl.BlockSpec((1, 1, ss, th + halo, ws, cin),
                               lambda b, t: (b, t, 0, 0, 0, 0)),
                  pl.BlockSpec((9 * cin, cout), lambda b, t: (0, 0)),
                  pl.BlockSpec((1, cout), lambda b, t: (0, 0))],
        out_specs=pl.BlockSpec((1, th, wo, cout), lambda b, t: (b, t, 0, 0)),
        compiler_params=_compiler_params(2, vmem_limit),
    )(win, w2, shift)


def conv3_identity_add_relu(h2d, w3, shift3, res2d, vmem_limit):
    m, kp = h2d.shape
    n = w3.shape[1]
    bpr = 2 * kp * 2 + 2 * n * 4 + 2 * n * 4 + n * 4
    tm = _pick_m_tile(m, bpr, vmem_limit // 2)
    return pl.pallas_call(
        _conv3_identity_kernel,
        out_shape=jax.ShapeDtypeStruct((m, n), jnp.float32),
        grid=(m // tm,),
        in_specs=[pl.BlockSpec((tm, kp), lambda i: (i, 0)),
                  pl.BlockSpec((kp, n), lambda i: (0, 0)),
                  pl.BlockSpec((1, n), lambda i: (0, 0)),
                  pl.BlockSpec((tm, n), lambda i: (i, 0))],
        out_specs=pl.BlockSpec((tm, n), lambda i: (i, 0)),
        compiler_params=_compiler_params(1, vmem_limit),
    )(h2d, w3, shift3, res2d)


def conv3_proj_add_relu(h2d, w3, shift3, xs2d, wsc, shiftsc, vmem_limit):
    m, kp = h2d.shape
    n = w3.shape[1]
    ksc = xs2d.shape[1]
    bpr = 2 * kp * 2 + 2 * ksc * 2 + 2 * n * 4 + 2 * n * 4
    tm = _pick_m_tile(m, bpr, vmem_limit // 2)
    return pl.pallas_call(
        _conv3_proj_kernel,
        out_shape=jax.ShapeDtypeStruct((m, n), jnp.float32),
        grid=(m // tm,),
        in_specs=[pl.BlockSpec((tm, kp), lambda i: (i, 0)),
                  pl.BlockSpec((kp, n), lambda i: (0, 0)),
                  pl.BlockSpec((1, n), lambda i: (0, 0)),
                  pl.BlockSpec((tm, ksc), lambda i: (i, 0)),
                  pl.BlockSpec((ksc, n), lambda i: (0, 0)),
                  pl.BlockSpec((1, n), lambda i: (0, 0))],
        out_specs=pl.BlockSpec((tm, n), lambda i: (i, 0)),
        compiler_params=_compiler_params(1, vmem_limit),
    )(h2d, w3, shift3, xs2d, wsc, shiftsc)


# --------------------------------------------------------------------------- #
# Plain-JAX glue: pad + polyphase split for the 3x3 conv (bf16, ~1x data)
# --------------------------------------------------------------------------- #
def _polyphase_pad(x_nhwc, stride):
    """Zero-pad H/W by 1, then split into stride*stride polyphase components so
    every 3x3 tap of the (possibly strided) conv is a contiguous static slice
    inside the kernel.  Total data volume stays ~1x (no im2col)."""
    n, h, w, c = x_nhwc.shape
    hp, wp = h + 2, w + 2
    hs, ws = -(-hp // stride), -(-wp // stride)
    xp = jnp.pad(x_nhwc, ((0, 0),
                          (1, 1 + hs * stride - hp),
                          (1, 1 + ws * stride - wp),
                          (0, 0)))
    xp = xp.reshape(n, hs, stride, ws, stride, c)
    xp = jnp.transpose(xp, (0, 2, 4, 1, 3, 5))
    return xp.reshape(n, stride * stride, hs, ws, c)


# --------------------------------------------------------------------------- #
# Parameters (shapes follow the PyTorch module); BN folded once at prep time
# --------------------------------------------------------------------------- #
def init_bottleneck_params(key, in_planes, planes, stride):
    expansion = 4
    keys = iter(jax.random.split(key, 16))

    def conv_w(cout, cin, k):
        std = 1.0 / math.sqrt(cin * k * k)
        return jax.random.normal(next(keys), (cout, cin, k, k), jnp.float32) * std

    def bn(c, eps=1e-5):
        k1, k2, k3, k4 = jax.random.split(next(keys), 4)
        gamma = jax.random.uniform(k1, (c,), minval=0.5, maxval=1.5)
        beta = jax.random.normal(k2, (c,)) * 0.1
        mean = jax.random.normal(k3, (c,)) * 0.1
        var = jax.random.uniform(k4, (c,), minval=0.5, maxval=1.5)
        scale = gamma / jnp.sqrt(var + eps)
        shift = beta - mean * scale
        return scale.astype(jnp.float32), shift.astype(jnp.float32)

    params = {
        'stride': stride,
        'conv1_w': conv_w(planes, in_planes, 1), 'bn1': bn(planes),
        'conv2_w': conv_w(planes, planes, 3),    'bn2': bn(planes),
        'conv3_w': conv_w(expansion * planes, planes, 1),
        'bn3': bn(expansion * planes),
    }
    if stride != 1 or in_planes != expansion * planes:
        params['sc_w'] = conv_w(expansion * planes, in_planes, 1)
        params['sc_bn'] = bn(expansion * planes)
    return params


def prepare_params(params):
    """Fold BN scale into matmul-layout weights (done once), cast to bf16."""
    def fold_1x1(w_t, bn):
        scale, shift = bn
        cout, cin = w_t.shape[0], w_t.shape[1]
        w = w_t.reshape(cout, cin).T * scale[None, :]
        return w.astype(jnp.bfloat16), shift.reshape(1, cout).astype(jnp.float32)

    def fold_3x3(w_t, bn):
        # (cout, cin, 3, 3) -> (9*cin, cout) in (dh, dw, cin) row order, matching
        # the kernel's tap-gather column order.
        scale, shift = bn
        cout, cin = w_t.shape[0], w_t.shape[1]
        w = jnp.transpose(w_t, (2, 3, 1, 0)).reshape(9 * cin, cout) * scale[None, :]
        return w.astype(jnp.bfloat16), shift.reshape(1, cout).astype(jnp.float32)

    prep = {'stride': params['stride']}
    prep['w1'], prep['b1'] = fold_1x1(params['conv1_w'], params['bn1'])
    prep['w2'], prep['b2'] = fold_3x3(params['conv2_w'], params['bn2'])
    prep['w3'], prep['b3'] = fold_1x1(params['conv3_w'], params['bn3'])
    if 'sc_w' in params:
        prep['wsc'], prep['bsc'] = fold_1x1(params['sc_w'], params['sc_bn'])
    return prep


# --------------------------------------------------------------------------- #
# Bottleneck forward
# --------------------------------------------------------------------------- #
def bottleneck_forward(x_nchw, prep):
    """Equivalent of Bottleneck.forward (eval-mode BN). NCHW in / NCHW out."""
    stride = prep['stride']
    vlim = _vmem_limit_bytes()
    x = jnp.transpose(x_nchw, (0, 2, 3, 1))            # NHWC, f32
    n, h, w, cin = x.shape
    planes = prep['w1'].shape[1]
    c4 = prep['w3'].shape[1]
    ho = (h - 1) // stride + 1
    wo = (w - 1) // stride + 1

    # conv1 (1x1) + bn1 + relu -> bf16 (largest intermediate; halves HBM traffic)
    h1 = matmul_bn_relu(x.reshape(n * h * w, cin), prep['w1'], prep['b1'],
                        jnp.bfloat16, vlim)            # (n*h*w, planes) bf16

    # conv2 (3x3, stride) + bn2 + relu -- one wide-K (9*cin) matmul per row tile
    h2 = conv3x3_bn_relu(h1.reshape(n, h, w, planes), prep['w2'], prep['b2'],
                         stride, vlim)                 # (n, ho, wo, planes) bf16
    h2_2d = h2.reshape(n * ho * wo, planes)

    # conv3 (1x1) + bn3, fused with shortcut + add + relu
    if 'wsc' in prep:
        xs = x[:, ::stride, ::stride, :].astype(jnp.bfloat16).reshape(n * ho * wo, cin)
        out2d = conv3_proj_add_relu(h2_2d, prep['w3'], prep['b3'],
                                    xs, prep['wsc'], prep['bsc'], vlim)
    else:
        out2d = conv3_identity_add_relu(h2_2d, prep['w3'], prep['b3'],
                                        x.reshape(n * h * w, c4), vlim)
    out = out2d.reshape(n, ho, wo, c4)
    return jnp.transpose(out, (0, 3, 1, 2))            # NCHW, f32


# --------------------------------------------------------------------------- #
# Pure-JAX f32 reference (for correctness check)
# --------------------------------------------------------------------------- #
def ref_bottleneck(x_nchw, params):
    x = jnp.transpose(x_nchw, (0, 2, 3, 1))

    def conv(x, w_t, stride, pad):
        w_hwio = jnp.transpose(w_t, (2, 3, 1, 0))
        return jax.lax.conv_general_dilated(
            x, w_hwio, (stride, stride), [(pad, pad), (pad, pad)],
            dimension_numbers=('NHWC', 'HWIO', 'NHWC'),
            precision=jax.lax.Precision.HIGHEST)

    def bn(x, p):
        s, sh = p
        return x * s + sh

    stride = params['stride']
    out = jax.nn.relu(bn(conv(x, params['conv1_w'], 1, 0), params['bn1']))
    out = jax.nn.relu(bn(conv(out, params['conv2_w'], stride, 1), params['bn2']))
    out = bn(conv(out, params['conv3_w'], 1, 0), params['bn3'])
    if 'sc_w' in params:
        sc = bn(conv(x, params['sc_w'], stride, 0), params['sc_bn'])
    else:
        sc = x
    out = jax.nn.relu(out + sc)
    return jnp.transpose(out, (0, 3, 1, 2))


# --------------------------------------------------------------------------- #
if __name__ == "__main__":
    key = jax.random.PRNGKey(0)
    kp1, kp2, kx = jax.random.split(key, 3)
    x = jax.random.normal(kx, (2, 64, 16, 16), jnp.float32)   # NCHW, like torch

    def check(out, ref, name):
        err = float(jnp.max(jnp.abs(out - ref)))
        denom = float(jnp.max(jnp.abs(ref))) + 1e-6
        if err / denom > 3e-2:
            raise AssertionError(
                f"{name}: relative error {err / denom:.4f} (abs {err:.4f})")

    # Case 1: identity shortcut (in_planes == expansion*planes, stride=1).
    params1 = init_bottleneck_params(kp1, in_planes=64, planes=16, stride=1)
    prep1 = prepare_params(params1)
    fwd1 = jax.jit(lambda xx: bottleneck_forward(xx, prep1))
    out1 = jax.block_until_ready(fwd1(x))
    assert out1.shape == (2, 64, 16, 16), out1.shape
    check(out1, ref_bottleneck(x, params1), "identity-shortcut")

    # Case 2: projection shortcut, stride 2.
    params2 = init_bottleneck_params(kp2, in_planes=64, planes=32, stride=2)
    prep2 = prepare_params(params2)
    fwd2 = jax.jit(lambda xx: bottleneck_forward(xx, prep2))
    out2 = jax.block_until_ready(fwd2(x))
    assert out2.shape == (2, 128, 8, 8), out2.shape
    check(out2, ref_bottleneck(x, params2), "projection-shortcut")

    print("KERNEL_OK")
</pallas_src>

<mosaic_0001>
module attributes {stable_mosaic.version = 11 : i64} {
  func.func @_matmul_bn_relu_kernel(%arg0: i32, %arg1: memref<128x64xf32, #tpu.memory_space<vmem>>, %arg2: memref<64x16xbf16, #tpu.memory_space<vmem>>, %arg3: memref<1x16xf32, #tpu.memory_space<vmem>>, %arg4: memref<128x16xbf16, #tpu.memory_space<vmem>>) attributes {dimension_semantics = [#tpu.dimension_semantics<parallel>], iteration_bounds = array<i64: 4>, scalar_prefetch = 0 : i64, scratch_operands = 0 : i64, tpu.core_type = #tpu.core_type<tc>, window_params = [{transform_indices = @transform_0, window_bounds = array<i64: 128, 64>}, {pipeline_mode = #tpu.pipeline_mode<synchronous>, transform_indices = @transform_1, window_bounds = array<i64: 64, 16>}, {pipeline_mode = #tpu.pipeline_mode<synchronous>, transform_indices = @transform_2, window_bounds = array<i64: 1, 16>}, {transform_indices = @transform_3, window_bounds = array<i64: 128, 16>}]} {
    %c0 = arith.constant 0 : index
    %c0_0 = arith.constant 0 : index
    %0 = vector.load %arg1[%c0, %c0_0] : memref<128x64xf32, #tpu.memory_space<vmem>>, vector<128x64xf32>
    %1 = arith.truncf %0 : vector<128x64xf32> to vector<128x64xbf16>
    %c0_1 = arith.constant 0 : index
    %c0_2 = arith.constant 0 : index
    %2 = vector.load %arg2[%c0_1, %c0_2] : memref<64x16xbf16, #tpu.memory_space<vmem>>, vector<64x16xbf16>
    %cst = arith.constant dense<0.000000e+00> : vector<128x16xf32>
    %3 = tpu.matmul %1, %2, %cst {dimension_numbers = #tpu.dot_dimension_numbers<[1], [0], [0], [1], [0, 0, 1, 1], [], []>} : vector<128x64xbf16>, vector<64x16xbf16>, vector<128x16xf32> -> vector<128x16xf32>
    %c0_3 = arith.constant 0 : index
    %c0_4 = arith.constant 0 : index
    %4 = vector.load %arg3[%c0_3, %c0_4] : memref<1x16xf32, #tpu.memory_space<vmem>>, vector<1x16xf32>
    %5 = vector.broadcast %4 : vector<1x16xf32> to vector<128x16xf32>
    %6 = arith.addf %3, %5 : vector<128x16xf32>
    %cst_5 = arith.constant 0.000000e+00 : f32
    %7 = vector.broadcast %cst_5 : f32 to vector<128x16xf32>
    %8 = arith.maximumf %6, %7 : vector<128x16xf32>
    %9 = arith.truncf %8 : vector<128x16xf32> to vector<128x16xbf16>
    %c0_6 = arith.constant 0 : index
    %c0_7 = arith.constant 0 : index
    %10 = vector.load %arg4[%c0_6, %c0_7] : memref<128x16xbf16, #tpu.memory_space<vmem>>, vector<128x16xbf16>
    tpu.vector_store %arg4[%c0_6, %c0_7], %9 {strides = array<i32>} : memref<128x16xbf16, #tpu.memory_space<vmem>>, vector<128x16xbf16>,
    return
  }
  func.func @transform_0(%arg0: i32) -> (i32, i32) {
    %c0_i32 = arith.constant 0 : i32
    %c0_i32_0 = arith.constant 0 : i32
    return %arg0, %c0_i32 : i32, i32
  }
  func.func @transform_1(%arg0: i32) -> (i32, i32) {
    %c0_i32 = arith.constant 0 : i32
    %c0_i32_0 = arith.constant 0 : i32
    %c0_i32_1 = arith.constant 0 : i32
    return %c0_i32, %c0_i32_0 : i32, i32
  }
  func.func @transform_2(%arg0: i32) -> (i32, i32) {
    %c0_i32 = arith.constant 0 : i32
    %c0_i32_0 = arith.constant 0 : i32
    %c0_i32_1 = arith.constant 0 : i32
    return %c0_i32, %c0_i32_0 : i32, i32
  }
  func.func @transform_3(%arg0: i32) -> (i32, i32) {
    %c0_i32 = arith.constant 0 : i32
    %c0_i32_0 = arith.constant 0 : i32
    return %arg0, %c0_i32 : i32, i32
  }
}

module attributes {stable_mosaic.version = 11 : i64} {
  func.func @kernel(%arg0: i32, %arg1: i32, %arg2: memref<1x1x1x10x18x16xbf16, #tpu.memory_space<vmem>>, %arg3: memref<144x16xbf16, #tpu.memory_space<vmem>>, %arg4: memref<1x16xf32, #tpu.memory_space<vmem>>, %arg5: memref<1x8x16x16xbf16, #tpu.memory_space<vmem>>) attributes {dimension_semantics = [#tpu.dimension_semantics<parallel>, #tpu.dimension_semantics<parallel>], iteration_bounds = array<i64: 2, 2>, scalar_prefetch = 0 : i64, scratch_operands = 0 : i64, tpu.core_type = #tpu.core_type<tc>, window_params = [{transform_indices = @transform_0, window_bounds = array<i64: 1, 1, 1, 10, 18, 16>}, {pipeline_mode = #tpu.pipeline_mode<synchronous>, transform_indices = @transform_1, window_bounds = array<i64: 144, 16>}, {pipeline_mode = #tpu.pipeline_mode<synchronous>, transform_indices = @transform_2, window_bounds = array<i64: 1, 16>}, {transform_indices = @transform_3, window_bounds = array<i64: 1, 8, 16, 16>}]} {
    %c0 = arith.constant 0 : index
    %c0_0 = arith.constant 0 : index
    %c0_1 = arith.constant 0 : index
    %c0_2 = arith.constant 0 : index
    %c0_3 = arith.constant 0 : index
    %c0_4 = arith.constant 0 : index
    %0 = vector.load %arg2[%c0, %c0_0, %c0_1, %c0_2, %c0_3, %c0_4] : memref<1x1x1x10x18x16xbf16, #tpu.memory_space<vmem>>, vector<1x1x1x10x18x16xbf16>
    %1 = vector.shape_cast %0 : vector<1x1x1x10x18x16xbf16> to vector<1x10x18x16xbf16>
    %2 = vector.extract_strided_slice %1 {offsets = [0, 0, 0, 0], sizes = [1, 8, 16, 16], strides = [1, 1, 1, 1]} : vector<1x10x18x16xbf16> to vector<1x8x16x16xbf16>
    %3 = vector.shape_cast %2 : vector<1x8x16x16xbf16> to vector<8x16x16xbf16>
    %4 = vector.extract_strided_slice %1 {offsets = [0, 0, 1, 0], sizes = [1, 8, 16, 16], strides = [1, 1, 1, 1]} : vector<1x10x18x16xbf16> to vector<1x8x16x16xbf16>
    %5 = vector.shape_cast %4 : vector<1x8x16x16xbf16> to vector<8x16x16xbf16>
    %6 = vector.extract_strided_slice %1 {offsets = [0, 0, 2, 0], sizes = [1, 8, 16, 16], strides = [1, 1, 1, 1]} : vector<1x10x18x16xbf16> to vector<1x8x16x16xbf16>
    %7 = vector.shape_cast %6 : vector<1x8x16x16xbf16> to vector<8x16x16xbf16>
    %8 = vector.extract_strided_slice %1 {offsets = [0, 1, 0, 0], sizes = [1, 8, 16, 16], strides = [1, 1, 1, 1]} : vector<1x10x18x16xbf16> to vector<1x8x16x16xbf16>
    %9 = vector.shape_cast %8 : vector<1x8x16x16xbf16> to vector<8x16x16xbf16>
    %10 = vector.extract_strided_slice %1 {offsets = [0, 1, 1, 0], sizes = [1, 8, 16, 16], strides = [1, 1, 1, 1]} : vector<1x10x18x16xbf16> to vector<1x8x16x16xbf16>
    %11 = vector.shape_cast %10 : vector<1x8x16x16xbf16> to vector<8x16x16xbf16>
    %12 = vector.extract_strided_slice %1 {offsets = [0, 1, 2, 0], sizes = [1, 8, 16, 16], strides = [1, 1, 1, 1]} : vector<1x10x18x16xbf16> to vector<1x8x16x16xbf16>
    %13 = vector.shape_cast %12 : vector<1x8x16x16xbf16> to vector<8x16x16xbf16>
    %14 = vector.extract_strided_slice %1 {offsets = [0, 2, 0, 0], sizes = [1, 8, 16, 16], strides = [1, 1, 1, 1]} : vector<1x10x18x16xbf16> to vector<1x8x16x16xbf16>
    %15 = vector.shape_cast %14 : vector<1x8x16x16xbf16> to vector<8x16x16xbf16>
    %16 = vector.extract_strided_slice %1 {offsets = [0, 2, 1, 0], sizes = [1, 8, 16, 16], strides = [1, 1, 1, 1]} : vector<1x10x18x16xbf16> to vector<1x8x16x16xbf16>
    %17 = vector.shape_cast %16 : vector<1x8x16x16xbf16> to vector<8x16x16xbf16>
    %18 = vector.extract_strided_slice %1 {offsets = [0, 2, 2, 0], sizes = [1, 8, 16, 16], strides = [1, 1, 1, 1]} : vector<1x10x18x16xbf16> to vector<1x8x16x16xbf16>
    %19 = vector.shape_cast %18 : vector<1x8x16x16xbf16> to vector<8x16x16xbf16>
    %20 = tpu.concatenate %3, %5, %7, %9, %11, %13, %15, %17, %19 in 2 : vector<8x16x16xbf16>, vector<8x16x16xbf16>, vector<8x16x16xbf16>, vector<8x16x16xbf16>, vector<8x16x16xbf16>, vector<8x16x16xbf16>, vector<8x16x16xbf16>, vector<8x16x16xbf16>, vector<8x16x16xbf16> -> vector<8x16x144xbf16>
    %21 = vector.shape_cast %20 : vector<8x16x144xbf16> to vector<128x144xbf16>
    %c0_5 = arith.constant 0 : index
    %c0_6 = arith.constant 0 : index
    %22 = vector.load %arg3[%c0_5, %c0_6] : memref<144x16xbf16, #tpu.memory_space<vmem>>, vector<144x16xbf16>
    %cst = arith.constant dense<0.000000e+00> : vector<128x16xf32>
    %23 = tpu.matmul %21, %22, %cst {dimension_numbers = #tpu.dot_dimension_numbers<[1], [0], [0], [1], [0, 0, 1, 1], [], []>} : vector<128x144xbf16>, vector<144x16xbf16>, vector<128x16xf32> -> vector<128x16xf32>
    %c0_7 = arith.constant 0 : index
    %c0_8 = arith.constant 0 : index
    %24 = vector.load %arg4[%c0_7, %c0_8] : memref<1x16xf32, #tpu.memory_space<vmem>>, vector<1x16xf32>
    %25 = vector.broadcast %24 : vector<1x16xf32> to vector<128x16xf32>
    %26 = arith.addf %23, %25 : vector<128x16xf32>
    %cst_9 = arith.constant 0.000000e+00 : f32
    %27 = vector.broadcast %cst_9 : f32 to vector<128x16xf32>
    %28 = arith.maximumf %26, %27 : vector<128x16xf32>
    %29 = vector.shape_cast %28 : vector<128x16xf32> to vector<8x16x16xf32>
    %30 = arith.truncf %29 : vector<8x16x16xf32> to vector<8x16x16xbf16>
    %c0_10 = arith.constant 0 : index
    %c0_11 = arith.constant 0 : index
    %c0_12 = arith.constant 0 : index
    %c0_13 = arith.constant 0 : index
    %31 = vector.load %arg5[%c0_10, %c0_11, %c0_12, %c0_13] : memref<1x8x16x16xbf16, #tpu.memory_space<vmem>>, vector<1x8x16x16xbf16>
    %32 = vector.shape_cast %31 : vector<1x8x16x16xbf16> to vector<8x16x16xbf16>
    %33 = vector.shape_cast %30 : vector<8x16x16xbf16> to vector<1x8x16x16xbf16>
    tpu.vector_store %arg5[%c0_10, %c0_11, %c0_12, %c0_13], %33 {strides = array<i32>} : memref<1x8x16x16xbf16, #tpu.memory_space<vmem>>, vector<1x8x16x16xbf16>,
    return
  }
  func.func @transform_0(%arg0: i32, %arg1: i32) -> (i32, i32, i32, i32, i32, i32) {
    %c0_i32 = arith.constant 0 : i32
    %c0_i32_0 = arith.constant 0 : i32
    %c0_i32_1 = arith.constant 0 : i32
    %c0_i32_2 = arith.constant 0 : i32
    %c0_i32_3 = arith.constant 0 : i32
    return %arg0, %arg1, %c0_i32, %c0_i32_0, %c0_i32_1, %c0_i32_2 : i32, i32, i32, i32, i32, i32
  }
  func.func @transform_1(%arg0: i32, %arg1: i32) -> (i32, i32) {
    %c0_i32 = arith.constant 0 : i32
    %c0_i32_0 = arith.constant 0 : i32
    %c0_i32_1 = arith.constant 0 : i32
    return %c0_i32, %c0_i32_0 : i32, i32
  }
  func.func @transform_2(%arg0: i32, %arg1: i32) -> (i32, i32) {
    %c0_i32 = arith.constant 0 : i32
    %c0_i32_0 = arith.constant 0 : i32
    %c0_i32_1 = arith.constant 0 : i32
    return %c0_i32, %c0_i32_0 : i32, i32
  }
  func.func @transform_3(%arg0: i32, %arg1: i32) -> (i32, i32, i32, i32) {
    %c0_i32 = arith.constant 0 : i32
    %c0_i32_0 = arith.constant 0 : i32
    %c0_i32_1 = arith.constant 0 : i32
    return %arg0, %arg1, %c0_i32, %c0_i32_0 : i32, i32, i32, i32
  }
}

module attributes {stable_mosaic.version = 11 : i64} {
  func.func @_conv3_identity_kernel(%arg0: i32, %arg1: memref<128x16xbf16, #tpu.memory_space<vmem>>, %arg2: memref<16x64xbf16, #tpu.memory_space<vmem>>, %arg3: memref<1x64xf32, #tpu.memory_space<vmem>>, %arg4: memref<128x64xf32, #tpu.memory_space<vmem>>, %arg5: memref<128x64xf32, #tpu.memory_space<vmem>>) attributes {dimension_semantics = [#tpu.dimension_semantics<parallel>], iteration_bounds = array<i64: 4>, scalar_prefetch = 0 : i64, scratch_operands = 0 : i64, tpu.core_type = #tpu.core_type<tc>, window_params = [{transform_indices = @transform_0, window_bounds = array<i64: 128, 16>}, {pipeline_mode = #tpu.pipeline_mode<synchronous>, transform_indices = @transform_1, window_bounds = array<i64: 16, 64>}, {pipeline_mode = #tpu.pipeline_mode<synchronous>, transform_indices = @transform_2, window_bounds = array<i64: 1, 64>}, {transform_indices = @transform_3, window_bounds = array<i64: 128, 64>}, {transform_indices = @transform_4, window_bounds = array<i64: 128, 64>}]} {
    %c0 = arith.constant 0 : index
    %c0_0 = arith.constant 0 : index
    %0 = vector.load %arg1[%c0, %c0_0] : memref<128x16xbf16, #tpu.memory_space<vmem>>, vector<128x16xbf16>
    %c0_1 = arith.constant 0 : index
    %c0_2 = arith.constant 0 : index
    %1 = vector.load %arg2[%c0_1, %c0_2] : memref<16x64xbf16, #tpu.memory_space<vmem>>, vector<16x64xbf16>
    %cst = arith.constant dense<0.000000e+00> : vector<128x64xf32>
    %2 = tpu.matmul %0, %1, %cst {dimension_numbers = #tpu.dot_dimension_numbers<[1], [0], [0], [1], [0, 0, 1, 1], [], []>} : vector<128x16xbf16>, vector<16x64xbf16>, vector<128x64xf32> -> vector<128x64xf32>
    %c0_3 = arith.constant 0 : index
    %c0_4 = arith.constant 0 : index
    %3 = vector.load %arg3[%c0_3, %c0_4] : memref<1x64xf32, #tpu.memory_space<vmem>>, vector<1x64xf32>
    %4 = vector.broadcast %3 : vector<1x64xf32> to vector<128x64xf32>
    %5 = arith.addf %2, %4 : vector<128x64xf32>
    %c0_5 = arith.constant 0 : index
    %c0_6 = arith.constant 0 : index
    %6 = vector.load %arg4[%c0_5, %c0_6] : memref<128x64xf32, #tpu.memory_space<vmem>>, vector<128x64xf32>
    %7 = arith.addf %5, %6 : vector<128x64xf32>
    %cst_7 = arith.constant 0.000000e+00 : f32
    %8 = vector.broadcast %cst_7 : f32 to vector<128x64xf32>
    %9 = arith.maximumf %7, %8 : vector<128x64xf32>
    %c0_8 = arith.constant 0 : index
    %c0_9 = arith.constant 0 : index
    %10 = vector.load %arg5[%c0_8, %c0_9] : memref<128x64xf32, #tpu.memory_space<vmem>>, vector<128x64xf32>
    tpu.vector_store %arg5[%c0_8, %c0_9], %9 {strides = array<i32>} : memref<128x64xf32, #tpu.memory_space<vmem>>, vector<128x64xf32>,
    return
  }
  func.func @transform_0(%arg0: i32) -> (i32, i32) {
    %c0_i32 = arith.constant 0 : i32
    %c0_i32_0 = arith.constant 0 : i32
    return %arg0, %c0_i32 : i32, i32
  }
  func.func @transform_1(%arg0: i32) -> (i32, i32) {
    %c0_i32 = arith.constant 0 : i32
    %c0_i32_0 = arith.constant 0 : i32
    %c0_i32_1 = arith.constant 0 : i32
    return %c0_i32, %c0_i32_0 : i32, i32
  }
  func.func @transform_2(%arg0: i32) -> (i32, i32) {
    %c0_i32 = arith.constant 0 : i32
    %c0_i32_0 = arith.constant 0 : i32
    %c0_i32_1 = arith.constant 0 : i32
    return %c0_i32, %c0_i32_0 : i32, i32
  }
  func.func @transform_3(%arg0: i32) -> (i32, i32) {
    %c0_i32 = arith.constant 0 : i32
    %c0_i32_0 = arith.constant 0 : i32
    return %arg0, %c0_i32 : i32, i32
  }
  func.func @transform_4(%arg0: i32) -> (i32, i32) {
    %c0_i32 = arith.constant 0 : i32
    %c0_i32_0 = arith.constant 0 : i32
    return %arg0, %c0_i32 : i32, i32
  }
}

</mosaic_0001>

<llo_original>
// kernel: _lambda_.3
$region0: #{_lambda_.3}
  #allocation0 [shape = 'u32[]', space=smem, size = 0x4, offset = 0x4, fixed_abs, tag = 'smem constant byte address 0x4 - core index']
  #allocation1 [shape = 'u32[144,128]{1,0:T(1,128)}', space=vmem, size = 0x12000, scoped, tag = 'internal scratch']
  %s0 = inlined_call_operand.hbm [shape: f32[512,64], index: 0, kind: input, shape index: {}]
  %s1 = inlined_call_operand.hbm [shape: bf16[64,16], index: 1, kind: input, shape index: {}]
  %s2 = inlined_call_operand.vmem [shape: f32[1,16], index: 2, kind: input, shape index: {}]
  %s3 = inlined_call_operand.vmem [shape: bf16[512,16], index: 3, kind: output, shape index: {}]
  %s4 = sld [smem:[#allocation0]]
  $region53: #{_lambda_.3} parent=0
    _
  %s6 = ssub.s32 1, %s4
  %s7 = scalar_select 0, %s6, %s4
  $region1: #{_lambda_.3} parent=0
    #allocation2 [shape = 'u8[131072]{0}', space=vmem, size = 0x20000, scoped, tag = 'input window, operand 0']
    #allocation3 [shape = 's32[2]{0}', space=sflag, size = 0x8, scoped, tag = 'scoped memory for _lambda_.3']
    #allocation4 [shape = 'u8[16384]{0}', space=vmem, size = 0x4000, scoped, tag = 'input window, operand 1, single buffered']
    #allocation5 [shape = 's32[1]{0}', space=sflag, size = 0x4, scoped, tag = 'scoped memory for _lambda_.3']
    %8 = vsyncpa [#allocation3], 0
    %s9 = scalar_lea.sflag [#allocation3], 1
    %10 = vsyncpa %s9, 0
    %11 = vsyncpa [#allocation5], 0
    loop: start=0, step=1, limit=6
    $region2: #{_lambda_.3} parent=1 // loop_pre_header
      _
    $region3: #{_lambda_.3} parent=1 // loop_header
      %s13 = sphi 0, %s17
      %p14 = scmp.ge.s32.totalorder %s13, 6
      %s23 = sphi 0, %s25
      %s26 = sphi 0, %s23
      %s27 = sphi 0, %s26
      %s43 = sphi 0, %s27
      %s47 = sphi 0, %s47
      %s49 = sphi 0, %s47
      %s50 = sphi 0, %s49
      %s64 = sphi 0, %s50
      %s68 = sphi 0, %s68
      %s70 = sphi 0, %s68
      %s71 = sphi 0, %s70
      %s85 = sphi 0, %s71
      %s91 = sphi 0, %s93
      %s94 = sphi 0, %s91
      %s95 = sphi 0, %s94
      %s111 = sphi 0, %s95
    $region4: #{_lambda_.3} parent=1 // loop_header_branch
      %16 = sbr.rel (%p14) target = $region8
    $region5: #{_lambda_.3} parent=1 // loop_body
      %s18 = ssub.s32 %s13, 1
      %s19 = ssub.s32 %s13, 2
      %s20 = sadd.s32 %s13, 1
      %s21 = ssub.s32 %s13, %s20
      %p22 = scmp.eq.s32.totalorder %s21, 0
      %s24 = sadd.s32 %s23, 1
      %s25 = scalar_select %p22, %s23, %s24
      %p28 = pneg %p22
      %p29 = scmp.eq.s32.totalorder %s13, 3
      %p30 = por %p28, %p29
      %p31 = scmp.ne.s32.totalorder %s23, %s26
      %p32 = scmp.eq.s32.totalorder %s13, 0
      %p33 = por %p31, %p32
      %p34 = scmp.ne.s32.totalorder %s23, %s26
      %p35 = scmp.eq.s32.totalorder %s18, 3
      %p36 = por %p34, %p35
      %p37 = scmp.ne.s32.totalorder %s26, %s27
      %p38 = scmp.eq.s32.totalorder %s18, 0
      %p39 = por %p37, %p38
      %p40 = scmp.ne.s32.totalorder %s26, %s27
      %p41 = scmp.eq.s32.totalorder %s19, 3
      %p42 = por %p40, %p41
      %p44 = scmp.ne.s32.totalorder %s27, %s43
      %p45 = scmp.eq.s32.totalorder %s19, 0
      %p46 = por %p44, %p45
      %s48 = sadd.s32 %s47, 1
      %p51 = scmp.eq.s32.totalorder %s13, 3
      %p52 = scmp.ne.s32.totalorder %s47, %s49
      %p53 = scmp.eq.s32.totalorder %s13, 0
      %p54 = por %p52, %p53
      %p55 = scmp.ne.s32.totalorder %s47, %s49
      %p56 = scmp.eq.s32.totalorder %s18, 3
      %p57 = por %p55, %p56
      %p58 = scmp.ne.s32.totalorder %s49, %s50
      %p59 = scmp.eq.s32.totalorder %s18, 0
      %p60 = por %p58, %p59
      %p61 = scmp.ne.s32.totalorder %s49, %s50
      %p62 = scmp.eq.s32.totalorder %s19, 3
      %p63 = por %p61, %p62
      %p65 = scmp.ne.s32.totalorder %s50, %s64
      %p66 = scmp.eq.s32.totalorder %s19, 0
      %p67 = por %p65, %p66
      %s69 = sadd.s32 %s68, 1
      %p72 = scmp.eq.s32.totalorder %s13, 3
      %p73 = scmp.ne.s32.totalorder %s68, %s70
      %p74 = scmp.eq.s32.totalorder %s13, 0
      %p75 = por %p73, %p74
      %p76 = scmp.ne.s32.totalorder %s68, %s70
      %p77 = scmp.eq.s32.totalorder %s18, 3
      %p78 = por %p76, %p77
      %p79 = scmp.ne.s32.totalorder %s70, %s71
      %p80 = scmp.eq.s32.totalorder %s18, 0
      %p81 = por %p79, %p80
      %p82 = scmp.ne.s32.totalorder %s70, %s71
      %p83 = scmp.eq.s32.totalorder %s19, 3
      %p84 = por %p82, %p83
      %p86 = scmp.ne.s32.totalorder %s71, %s85
      %p87 = scmp.eq.s32.totalorder %s19, 0
      %p88 = por %p86, %p87
      %s89 = ssub.s32 %s13, %s20
      %p90 = scmp.eq.s32.totalorder %s89, 0
      %s92 = sadd.s32 %s91, 1
      %s93 = scalar_select %p90, %s91, %s92
      %p96 = pneg %p90
      %p97 = scmp.eq.s32.totalorder %s13, 3
      %p98 = por %p96, %p97
      %p99 = scmp.ne.s32.totalorder %s91, %s94
      %p100 = scmp.eq.s32.totalorder %s13, 0
      %p101 = por %p99, %p100
      %p102 = scmp.ne.s32.totalorder %s91, %s94
      %p103 = scmp.eq.s32.totalorder %s18, 3
      %p104 = por %p102, %p103
      %p105 = scmp.ne.s32.totalorder %s94, %s95
      %p106 = scmp.eq.s32.totalorder %s18, 0
      %p107 = por %p105, %p106
      %p108 = scmp.ne.s32.totalorder %s94, %s95
      %p109 = scmp.eq.s32.totalorder %s19, 3
      %p110 = por %p108, %p109
      %p112 = scmp.ne.s32.totalorder %s95, %s111
      %p113 = scmp.eq.s32.totalorder %s19, 0
      %p114 = por %p112, %p113
      %p115 = scmp.le.s32.totalorder 1, %s13
      %p116 = scmp.lt.s32.totalorder %s13, 5
      %p117 = pnand %p115, %p116
      %p118 = pneg %p117
      // Predicated region
      $region9: #{_lambda_.3} parent=5 // pred_check
        _
      $region10: #{_lambda_.3} parent=5 // pred_check_branch
        %120 = sbr.rel (%p117) target = $region12
      $region11: #{_lambda_.3} parent=5 // pred_region
        %s121 = ssub.s32 %s13, 1
        // Predicated region
        $region13: #{_lambda_.3} parent=11 // pred_check
          %p122 = pneg %p60
        $region14: #{_lambda_.3} parent=11 // pred_check_branch
          %124 = sbr.rel (%p122) target = $region16
        $region15: #{_lambda_.3} parent=11 // pred_region
          %s126 = ssub.s32 512, 512
          %127 = vsyncadd [#allocation5], %s126
          %s128 = sshll.u32 [#allocation4], 4
          %s129 = int_to_ptr.vmem [resolvable:$true] %s128
          %134 = dma.hbm_to_vmem [thread:$0]  %s1, 512, %s129, [#allocation5], 64, 64, 4
        $region16: #{_lambda_.3} parent=11 // pred_fallthru
          _
        // Predicated region
        $region17: #{_lambda_.3} parent=11 // pred_check
          %p135 = pneg %p81
        $region18: #{_lambda_.3} parent=11 // pred_check_branch
          %137 = sbr.rel (%p135) target = $region20
        $region19: #{_lambda_.3} parent=11 // pred_region
          _
        $region20: #{_lambda_.3} parent=11 // pred_fallthru
          _
      $region12: #{_lambda_.3} parent=5 // pred_fallthru
        _
      %p138 = scmp.lt.s32.totalorder %s13, 4
      // Predicated region
      $region21: #{_lambda_.3} parent=5 // pred_check
        %p139 = pneg %p138
      $region22: #{_lambda_.3} parent=5 // pred_check_branch
        %141 = sbr.rel (%p139) target = $region24
      $region23: #{_lambda_.3} parent=5 // pred_region
        // Predicated region
        $region25: #{_lambda_.3} parent=23 // pred_check
          %p142 = pneg %p33
        $region26: #{_lambda_.3} parent=23 // pred_check_branch
          %144 = sbr.rel (%p142) target = $region28
        $region27: #{_lambda_.3} parent=23 // pred_region
          %s145 = sand.u32 %s23, 1
          %s146 = scalar_lea.sflag [#allocation3], %s145
          %s147 = sand.u32 %s23, 1
          %s148 = smul.addr %s147, 128
          %s149 = scalar_lea.vmem [#allocation2], %s148
          %s150 = smul.u32 16, %s13
          %s152 = ssub.s32 2048, 2048
          %153 = vsyncadd %s146, %s152
          %s154 = smul.addr %s150, 128
          %s155 = scalar_lea.hbm %s0, %s154
          %s156 = sshll.u32 %s149, 4
          %s157 = int_to_ptr.vmem [resolvable:$true] %s156
          %162 = dma.hbm_to_vmem [thread:$0]  %s155, 2048, %s157, %s146, 128, 128, 8
        $region28: #{_lambda_.3} parent=23 // pred_fallthru
          _
      $region24: #{_lambda_.3} parent=5 // pred_fallthru
        _
      %p163 = scmp.le.s32.totalorder 1, %s13
      %p164 = scmp.lt.s32.totalorder %s13, 5
      %p165 = pnand %p163, %p164
      %p166 = pneg %p165
      // Predicated region
      $region29: #{_lambda_.3} parent=5 // pred_check
        _
      $region30: #{_lambda_.3} parent=5 // pred_check_branch
        %168 = sbr.rel (%p165) target = $region32
      $region31: #{_lambda_.3} parent=5 // pred_region
        %s169 = ssub.s32 %s13, 1
        %s170 = sand.u32 %s26, 1
        %s171 = scalar_lea.sflag [#allocation3], %s170
        %s172 = sand.u32 %s26, 1
        %s173 = smul.addr %s172, 128
        %s174 = scalar_lea.vmem [#allocation2], %s173
        // Predicated region
        $region33: #{_lambda_.3} parent=31 // pred_check
          %p175 = pneg %p39
        $region34: #{_lambda_.3} parent=31 // pred_check_branch
          %177 = sbr.rel (%p175) target = $region36
        $region35: #{_lambda_.3} parent=31 // pred_region
          %178 = dma.done %s171, 2048
        $region36: #{_lambda_.3} parent=31 // pred_fallthru
          _
        // Predicated region
        $region37: #{_lambda_.3} parent=31 // pred_check
          %p179 = pneg %p60
        $region38: #{_lambda_.3} parent=31 // pred_check_branch
          %181 = sbr.rel (%p179) target = $region40
        $region39: #{_lambda_.3} parent=31 // pred_region
          %182 = dma.done [#allocation5], 512
        $region40: #{_lambda_.3} parent=31 // pred_fallthru
          _
        %s183 = sand.u32 %s26, 1
        %s184 = scalar_lea.sflag [#allocation3], %s183
        %s185 = sand.u32 %s26, 1
        %s186 = smul.addr %s185, 128
        %s187 = scalar_lea.vmem [#allocation2], %s186
        %p188 = pneg %p39
        %p189 = pneg %p36
        %p190 = pneg %p60
        %p191 = pneg %p57
        %p192 = pneg %p81
        %p193 = pneg %p78
        %p194 = pneg %p107
        %p195 = pneg %p104
        %s196 = smul.u32 16, %s18
        %p197 = scmp.lt.s32.totalorder %s196, 63
        %s198 = scalar_select %p197, %s196, 63
        %s199 = smul.addr %s198, 4
        %s200 = scalar_lea.vmem %s3, %s199
        %s201 = smul.u32 16, %s18
        %s202 = smul.u32 16, %s18
        %p203 = scmp.lt.s32.totalorder %s202, 63
        %s204 = scalar_select %p203, %s202, 63
        %s205 = smul.addr %s204, 4
        %s206 = scalar_lea.vmem %s3, %s205
        %s207 = smul.u32 16, %s18
        %v209 = vld [vmem:[%s174] sm:$0xff]
        %v210 = vld [vmem:[%s174 + $0x8] sm:$0xff]
        %v211 = vld [vmem:[%s174 + $0x10] sm:$0xff]
        %v212 = vld [vmem:[%s174 + $0x18] sm:$0xff]
        %v213 = vld [vmem:[%s174 + $0x20] sm:$0xff]
        %v214 = vld [vmem:[%s174 + $0x28] sm:$0xff]
        %v215 = vld [vmem:[%s174 + $0x30] sm:$0xff]
        %v216 = vld [vmem:[%s174 + $0x38] sm:$0xff]
        %v217 = vld [vmem:[%s174 + $0x40] sm:$0xff]
        %v218 = vld [vmem:[%s174 + $0x48] sm:$0xff]
        %v219 = vld [vmem:[%s174 + $0x50] sm:$0xff]
        %v220 = vld [vmem:[%s174 + $0x58] sm:$0xff]
        %v221 = vld [vmem:[%s174 + $0x60] sm:$0xff]
        %v222 = vld [vmem:[%s174 + $0x68] sm:$0xff]
        %v223 = vld [vmem:[%s174 + $0x70] sm:$0xff]
        %v224 = vld [vmem:[%s174 + $0x78] sm:$0xff]
        %v225 = vpack.c.bf16 %v210, %v209
        %v226 = vpack.c.bf16 %v212, %v211
        %v227 = vpack.c.bf16 %v214, %v213
        %v228 = vpack.c.bf16 %v216, %v215
        %v229 = vpack.c.bf16 %v218, %v217
        %v230 = vpack.c.bf16 %v220, %v219
        %v231 = vpack.c.bf16 %v222, %v221
        %v232 = vpack.c.bf16 %v224, %v223
        %v233 = vld [vmem:[#allocation4] sm:$0xf]
        %v234 = vld [vmem:[#allocation4 + $0x4] sm:$0xf]
        %v235 = vld [vmem:[#allocation4 + $0x8] sm:$0xf]
        %v236 = vld [vmem:[#allocation4 + $0xc] sm:$0xf]
        %v237 = vld [vmem:[#allocation4 + $0x10] sm:$0xf]
        %v238 = vld [vmem:[#allocation4 + $0x14] sm:$0xf]
        %v239 = vld [vmem:[#allocation4 + $0x18] sm:$0xf]
        %v240 = vld [vmem:[#allocation4 + $0x1c] sm:$0xf]
        %v241 = vld [vmem:[%s2] sm:$0x1]
        %v243 = vlaneseq
        %v244 = vshrl.u32 %v243, 7
        %v245 = vsub.s32 0, %v244
        %v246 = vrot.slane %v241, %v245
        %v256 = vunpack.c.l.b16 %v233
        %v257 = vunpack.c.l.b16 %v234
        %v258 = vunpack.c.l.b16 %v235
        %v259 = vunpack.c.l.b16 %v236
        %v260 = vunpack.c.l.b16 %v237
        %v261 = vunpack.c.l.b16 %v238
        %v262 = vunpack.c.l.b16 %v239
        %v263 = vunpack.c.l.b16 %v240
        %v264 = vpack.c.b16 %v257, %v256
        %v265 = vpack.c.b16 %v259, %v258
        %v266 = vpack.c.b16 %v261, %v260
        %v267 = vpack.c.b16 %v263, %v262
        %vm272 = vcmask 523264
        %v274 = vsel %vm272, %v225, 0
        %v277 = vsel %vm272, %v226, 0
        %v280 = vsel %vm272, %v227, 0
        %v283 = vsel %vm272, %v228, 0
        %v286 = vsel %vm272, %v229, 0
        %v289 = vsel %vm272, %v230, 0
        %v292 = vsel %vm272, %v231, 0
        %v295 = vsel %vm272, %v232, 0
        %297 = vmatprep.subr.bf16.mxu0 0
        %298 = vmatpush1.bf16.msra.mxu0 %v264
        %299 = vmatprep.subr.bf16.mxu0 0
        %300 = vmatpush1.bf16.msra.mxu0 %v265
        %301 = vmatprep.subr.bf16.mxu0 0
        %302 = vmatpush1.bf16.msra.mxu0 %v266
        %303 = vmatprep.subr.bf16.mxu0 0
        %304 = vmatpush1.bf16.msra.mxu0 %v267
        %305 = vmatprep.subr.bf16.mxu0 0
        %306 = vmatpush1.bf16.msra.mxu0 0
        %307 = vmatprep.subr.bf16.mxu0 0
        %308 = vmatpush1.bf16.msra.mxu0 0
        %309 = vmatprep.subr.bf16.mxu0 0
        %310 = vmatpush1.bf16.msra.mxu0 0
        %311 = vmatprep.subr.bf16.mxu0 0
        %312 = vmatpush1.bf16.msra.mxu0 0
        %313 = vmatprep.subr.bf16.mxu0 0
        %314 = vmatpush1.bf16.msra.mxu0 0
        %315 = vmatprep.subr.bf16.mxu0 0
        %316 = vmatpush1.bf16.msra.mxu0 0
        %317 = vmatprep.subr.bf16.mxu0 0
        %318 = vmatpush1.bf16.msra.mxu0 0
        %319 = vmatprep.subr.bf16.mxu0 0
        %320 = vmatpush1.bf16.msra.mxu0 0
        %321 = vmatprep.subr.bf16.mxu0 0
        %322 = vmatpush1.bf16.msra.mxu0 0
        %323 = vmatprep.subr.bf16.mxu0 0
        %324 = vmatpush1.bf16.msra.mxu0 0
        %325 = vmatprep.subr.bf16.mxu0 0
        %326 = vmatpush1.bf16.msra.mxu0 0
        %327 = vmatprep.subr.bf16.mxu0 0
        %328 = vmatpush1.bf16.msra.mxu0 0
        %329 = vmatprep.mubr.bf16.mxu0 0
        %330 = vmatmul.mubr.bf16.gmra.mrb[0].mxu0 %v274
        %v331 = vpop.f32.mrb[0].mxu0
        %v332 = vadd.f32 %v246, %v331
        %v333 = vpop.f32.mrb[0].mxu0
        %v334 = vpop.f32.mrb[0].mxu0
        %v335 = vadd.f32 %v246, %v334
        %v336 = vpop.f32.mrb[0].mxu0
        %337 = vmatprep.mubr.bf16.mxu0 0
        %338 = vmatmul.mubr.bf16.gmra.mrb[0].mxu0 %v277
        %v339 = vpop.f32.mrb[0].mxu0
        %v340 = vadd.f32 %v246, %v339
        %v341 = vpop.f32.mrb[0].mxu0
        %v342 = vpop.f32.mrb[0].mxu0
        %v343 = vadd.f32 %v246, %v342
        %v344 = vpop.f32.mrb[0].mxu0
        %345 = vmatprep.mubr.bf16.mxu0 0
        %346 = vmatmul.mubr.bf16.gmra.mrb[0].mxu0 %v280
        %v347 = vpop.f32.mrb[0].mxu0
        %v348 = vadd.f32 %v246, %v347
        %v349 = vpop.f32.mrb[0].mxu0
        %v350 = vpop.f32.mrb[0].mxu0
        %v351 = vadd.f32 %v246, %v350
        %v352 = vpop.f32.mrb[0].mxu0
        %353 = vmatprep.mubr.bf16.mxu0 0
        %354 = vmatmul.mubr.bf16.gmra.mrb[0].mxu0 %v283
        %v355 = vpop.f32.mrb[0].mxu0
        %v356 = vadd.f32 %v246, %v355
        %v357 = vpop.f32.mrb[0].mxu0
        %v358 = vpop.f32.mrb[0].mxu0
        %v359 = vadd.f32 %v246, %v358
        %v360 = vpop.f32.mrb[0].mxu0
        %361 = vmatprep.mubr.bf16.mxu0 0
        %362 = vmatmul.mubr.bf16.gmra.mrb[0].mxu0 %v286
        %v363 = vpop.f32.mrb[0].mxu0
        %v364 = vadd.f32 %v246, %v363
        %v365 = vpop.f32.mrb[0].mxu0
        %v366 = vpop.f32.mrb[0].mxu0
        %v367 = vadd.f32 %v246, %v366
        %v368 = vpop.f32.mrb[0].mxu0
        %369 = vmatprep.mubr.bf16.mxu0 0
        %370 = vmatmul.mubr.bf16.gmra.mrb[0].mxu0 %v289
        %v371 = vpop.f32.mrb[0].mxu0
        %v372 = vadd.f32 %v246, %v371
        %v373 = vpop.f32.mrb[0].mxu0
        %v374 = vpop.f32.mrb[0].mxu0
        %v375 = vadd.f32 %v246, %v374
        %v376 = vpop.f32.mrb[0].mxu0
        %377 = vmatprep.mubr.bf16.mxu0 0
        %378 = vmatmul.mubr.bf16.gmra.mrb[0].mxu0 %v292
        %v379 = vpop.f32.mrb[0].mxu0
        %v380 = vadd.f32 %v246, %v379
        %v381 = vpop.f32.mrb[0].mxu0
        %v382 = vpop.f32.mrb[0].mxu0
        %v383 = vadd.f32 %v246, %v382
        %v384 = vpop.f32.mrb[0].mxu0
        %385 = vmatprep.mubr.bf16.mxu0 0
        %386 = vmatmul.mubr.bf16.gmra.mrb[0].mxu0 %v295
        %v387 = vpop.f32.mrb[0].mxu0
        %v388 = vadd.f32 %v246, %v387
        %v389 = vpop.f32.mrb[0].mxu0
        %v390 = vpop.f32.mrb[0].mxu0
        %v391 = vadd.f32 %v246, %v390
        %v392 = vpop.f32.mrb[0].mxu0
        %393 = vdwg.mxu0
        %v394 = vmax.f32 %v332, 0.0
        %v395 = vmax.f32 %v335, 0.0
        %v396 = vmax.f32 %v340, 0.0
        %v397 = vmax.f32 %v343, 0.0
        %v398 = vmax.f32 %v348, 0.0
        %v399 = vmax.f32 %v351, 0.0
        %v400 = vmax.f32 %v356, 0.0
        %v401 = vmax.f32 %v359, 0.0
        %v402 = vmax.f32 %v364, 0.0
        %v403 = vmax.f32 %v367, 0.0
        %v404 = vmax.f32 %v372, 0.0
        %v405 = vmax.f32 %v375, 0.0
        %v406 = vmax.f32 %v380, 0.0
        %v407 = vmax.f32 %v383, 0.0
        %v408 = vmax.f32 %v388, 0.0
        %v409 = vmax.f32 %v391, 0.0
        %v410 = vpack.c.bf16 %v395, %v394
        %v411 = vpack.c.bf16 %v397, %v396
        %v412 = vpack.c.bf16 %v399, %v398
        %v413 = vpack.c.bf16 %v401, %v400
        %v414 = vpack.c.bf16 %v403, %v402
        %v415 = vpack.c.bf16 %v405, %v404
        %v416 = vpack.c.bf16 %v407, %v406
        %v417 = vpack.c.bf16 %v409, %v408
        %v426 = vunpack.c.l.b16 %v410
        %v427 = vunpack.c.h.b16 %v410
        %v428 = vunpack.c.l.b16 %v411
        %v429 = vunpack.c.h.b16 %v411
        %v430 = vunpack.c.l.b16 %v412
        %v431 = vunpack.c.h.b16 %v412
        %v432 = vunpack.c.l.b16 %v413
        %v433 = vunpack.c.h.b16 %v413
        %v434 = vunpack.c.l.b16 %v414
        %v435 = vunpack.c.h.b16 %v414
        %v436 = vunpack.c.l.b16 %v415
        %v437 = vunpack.c.h.b16 %v415
        %v438 = vunpack.c.l.b16 %v416
        %v439 = vunpack.c.h.b16 %v416
        %v440 = vunpack.c.l.b16 %v417
        %v441 = vunpack.c.h.b16 %v417
        %v442 = vpack.c.b16 %v426, %v426
        %v443 = vpack.c.b16 %v427, %v427
        %v444 = vpack.c.b16 %v428, %v428
        %v445 = vpack.c.b16 %v429, %v429
        %v446 = vpack.c.b16 %v430, %v430
        %v447 = vpack.c.b16 %v431, %v431
        %v448 = vpack.c.b16 %v432, %v432
        %v449 = vpack.c.b16 %v433, %v433
        %v450 = vpack.c.b16 %v434, %v434
        %v451 = vpack.c.b16 %v435, %v435
        %v452 = vpack.c.b16 %v436, %v436
        %v453 = vpack.c.b16 %v437, %v437
        %v454 = vpack.c.b16 %v438, %v438
        %v455 = vpack.c.b16 %v439, %v439
        %v456 = vpack.c.b16 %v440, %v440
        %v457 = vpack.c.b16 %v441, %v441
        %vm474 = vcmask 125952
        %475 = vst.msk [vmem:[%s206] sm:$0xf] %vm474, %v442
        %476 = vst.msk [vmem:[%s206 + $0x4] sm:$0xf] %vm474, %v443
        %477 = vst.msk [vmem:[%s206 + $0x8] sm:$0xf] %vm474, %v444
        %478 = vst.msk [vmem:[%s206 + $0xc] sm:$0xf] %vm474, %v445
        %479 = vst.msk [vmem:[%s206 + $0x10] sm:$0xf] %vm474, %v446
        %480 = vst.msk [vmem:[%s206 + $0x14] sm:$0xf] %vm474, %v447
        %481 = vst.msk [vmem:[%s206 + $0x18] sm:$0xf] %vm474, %v448
        %482 = vst.msk [vmem:[%s206 + $0x1c] sm:$0xf] %vm474, %v449
        %483 = vst.msk [vmem:[%s206 + $0x20] sm:$0xf] %vm474, %v450
        %484 = vst.msk [vmem:[%s206 + $0x24] sm:$0xf] %vm474, %v451
        %485 = vst.msk [vmem:[%s206 + $0x28] sm:$0xf] %vm474, %v452
        %486 = vst.msk [vmem:[%s206 + $0x2c] sm:$0xf] %vm474, %v453
        %487 = vst.msk [vmem:[%s206 + $0x30] sm:$0xf] %vm474, %v454
        %488 = vst.msk [vmem:[%s206 + $0x34] sm:$0xf] %vm474, %v455
        %489 = vst.msk [vmem:[%s206 + $0x38] sm:$0xf] %vm474, %v456
        %490 = vst.msk [vmem:[%s206 + $0x3c] sm:$0xf] %vm474, %v457
        %s491 = smul.u32 16, %s18
        %p492 = scmp.lt.s32.totalorder %s491, 63
        %s493 = scalar_select %p492, %s491, 63
        %s494 = smul.addr %s493, 4
        %s495 = scalar_lea.vmem %s3, %s494
        // Predicated region
        $region41: #{_lambda_.3} parent=31 // pred_check
          %p496 = pneg %p104
        $region42: #{_lambda_.3} parent=31 // pred_check_branch
          %498 = sbr.rel (%p496) target = $region44
        $region43: #{_lambda_.3} parent=31 // pred_region
          %s499 = smul.u32 16, %s18
        $region44: #{_lambda_.3} parent=31 // pred_fallthru
          _
      $region32: #{_lambda_.3} parent=5 // pred_fallthru
        _
      %p500 = scmp.le.s32.totalorder 2, %s13
      // Predicated region
      $region45: #{_lambda_.3} parent=5 // pred_check
        %p501 = pneg %p500
      $region46: #{_lambda_.3} parent=5 // pred_check_branch
        %503 = sbr.rel (%p501) target = $region48
      $region47: #{_lambda_.3} parent=5 // pred_region
        %s504 = ssub.s32 %s13, 2
        // Predicated region
        $region49: #{_lambda_.3} parent=47 // pred_check
          %p505 = pneg %p110
        $region50: #{_lambda_.3} parent=47 // pred_check_branch
          %507 = sbr.rel (%p505) target = $region52
        $region51: #{_lambda_.3} parent=47 // pred_region
          %s508 = smul.u32 16, %s19
          %p509 = scmp.lt.s32.totalorder %s508, 63
          %s510 = scalar_select %p509, %s508, 63
          %s511 = smul.addr %s510, 4
          %s512 = scalar_lea.vmem %s3, %s511
        $region52: #{_lambda_.3} parent=47 // pred_fallthru
          _
      $region48: #{_lambda_.3} parent=5 // pred_fallthru
        _
    $region6: #{_lambda_.3} parent=1 // loop_footer
      %s17 = sadd.s32 1, %s13
    $region7: #{_lambda_.3} parent=1 // loop_footer_branch
      %12 = sbr.rel target = $region3
    $region8: #{_lambda_.3} parent=1 // loop_exit
      _
    %513 = vsyncpa [#allocation3], 1
    %s514 = scalar_lea.sflag [#allocation3], 1
    %515 = vsyncpa %s514, 1
    %516 = vsyncpa [#allocation5], 1

// kernel: _lambda_.5
$region0: #{_lambda_.5}
  #allocation0 [shape = 'u32[]', space=smem, size = 0x4, offset = 0x4, fixed_abs, tag = 'smem constant byte address 0x4 - core index']
  #allocation1 [shape = 'u32[144,128]{1,0:T(1,128)}', space=vmem, size = 0x12000, scoped, tag = 'internal scratch']
  %s0 = inlined_call_operand.vmem [shape: bf16[512,16], index: 0, kind: input, shape index: {}]
  %s1 = inlined_call_operand.vmem [shape: bf16[16,64], index: 1, kind: input, shape index: {}]
  %s2 = inlined_call_operand.vmem [shape: f32[1,64], index: 2, kind: input, shape index: {}]
  %s3 = inlined_call_operand.vmem [shape: f32[512,64], index: 3, kind: input, shape index: {}]
  %s4 = inlined_call_operand.hbm [shape: f32[512,64], index: 4, kind: output, shape index: {}]
  %s5 = sld [smem:[#allocation0]]
  $region49: #{_lambda_.5} parent=0
    _
  %s7 = ssub.s32 1, %s5
  %s8 = scalar_select 0, %s7, %s5
  $region1: #{_lambda_.5} parent=0
    #allocation2 [shape = 'u8[131072]{0}', space=vmem, size = 0x20000, scoped, tag = 'output window, operand 0']
    #allocation3 [shape = 's32[2]{0}', space=sflag, size = 0x8, scoped, tag = 'scoped memory for _lambda_.5']
    %9 = vsyncpa [#allocation3], 0
    %s10 = scalar_lea.sflag [#allocation3], 1
    %11 = vsyncpa %s10, 0
    loop: start=0, step=1, limit=6
    $region2: #{_lambda_.5} parent=1 // loop_pre_header
      _
    $region3: #{_lambda_.5} parent=1 // loop_header
      %s13 = sphi 0, %s17
      %p14 = scmp.ge.s32.totalorder %s13, 6
      %s23 = sphi 0, %s25
      %s26 = sphi 0, %s23
      %s27 = sphi 0, %s26
      %s43 = sphi 0, %s27
      %s47 = sphi 0, %s47
      %s49 = sphi 0, %s47
      %s50 = sphi 0, %s49
      %s64 = sphi 0, %s50
      %s68 = sphi 0, %s68
      %s70 = sphi 0, %s68
      %s71 = sphi 0, %s70
      %s85 = sphi 0, %s71
      %s91 = sphi 0, %s93
      %s94 = sphi 0, %s91
      %s95 = sphi 0, %s94
      %s111 = sphi 0, %s95
      %s117 = sphi 0, %s119
      %s120 = sphi 0, %s117
      %s121 = sphi 0, %s120
      %s137 = sphi 0, %s121
    $region4: #{_lambda_.5} parent=1 // loop_header_branch
      %16 = sbr.rel (%p14) target = $region8
    $region5: #{_lambda_.5} parent=1 // loop_body
      %s18 = ssub.s32 %s13, 1
      %s19 = ssub.s32 %s13, 2
      %s20 = sadd.s32 %s13, 1
      %s21 = ssub.s32 %s13, %s20
      %p22 = scmp.eq.s32.totalorder %s21, 0
      %s24 = sadd.s32 %s23, 1
      %s25 = scalar_select %p22, %s23, %s24
      %p28 = pneg %p22
      %p29 = scmp.eq.s32.totalorder %s13, 3
      %p30 = por %p28, %p29
      %p31 = scmp.ne.s32.totalorder %s23, %s26
      %p32 = scmp.eq.s32.totalorder %s13, 0
      %p33 = por %p31, %p32
      %p34 = scmp.ne.s32.totalorder %s23, %s26
      %p35 = scmp.eq.s32.totalorder %s18, 3
      %p36 = por %p34, %p35
      %p37 = scmp.ne.s32.totalorder %s26, %s27
      %p38 = scmp.eq.s32.totalorder %s18, 0
      %p39 = por %p37, %p38
      %p40 = scmp.ne.s32.totalorder %s26, %s27
      %p41 = scmp.eq.s32.totalorder %s19, 3
      %p42 = por %p40, %p41
      %p44 = scmp.ne.s32.totalorder %s27, %s43
      %p45 = scmp.eq.s32.totalorder %s19, 0
      %p46 = por %p44, %p45
      %s48 = sadd.s32 %s47, 1
      %p51 = scmp.eq.s32.totalorder %s13, 3
      %p52 = scmp.ne.s32.totalorder %s47, %s49
      %p53 = scmp.eq.s32.totalorder %s13, 0
      %p54 = por %p52, %p53
      %p55 = scmp.ne.s32.totalorder %s47, %s49
      %p56 = scmp.eq.s32.totalorder %s18, 3
      %p57 = por %p55, %p56
      %p58 = scmp.ne.s32.totalorder %s49, %s50
      %p59 = scmp.eq.s32.totalorder %s18, 0
      %p60 = por %p58, %p59
      %p61 = scmp.ne.s32.totalorder %s49, %s50
      %p62 = scmp.eq.s32.totalorder %s19, 3
      %p63 = por %p61, %p62
      %p65 = scmp.ne.s32.totalorder %s50, %s64
      %p66 = scmp.eq.s32.totalorder %s19, 0
      %p67 = por %p65, %p66
      %s69 = sadd.s32 %s68, 1
      %p72 = scmp.eq.s32.totalorder %s13, 3
      %p73 = scmp.ne.s32.totalorder %s68, %s70
      %p74 = scmp.eq.s32.totalorder %s13, 0
      %p75 = por %p73, %p74
      %p76 = scmp.ne.s32.totalorder %s68, %s70
      %p77 = scmp.eq.s32.totalorder %s18, 3
      %p78 = por %p76, %p77
      %p79 = scmp.ne.s32.totalorder %s70, %s71
      %p80 = scmp.eq.s32.totalorder %s18, 0
      %p81 = por %p79, %p80
      %p82 = scmp.ne.s32.totalorder %s70, %s71
      %p83 = scmp.eq.s32.totalorder %s19, 3
      %p84 = por %p82, %p83
      %p86 = scmp.ne.s32.totalorder %s71, %s85
      %p87 = scmp.eq.s32.totalorder %s19, 0
      %p88 = por %p86, %p87
      %s89 = ssub.s32 %s13, %s20
      %p90 = scmp.eq.s32.totalorder %s89, 0
      %s92 = sadd.s32 %s91, 1
      %s93 = scalar_select %p90, %s91, %s92
      %p96 = pneg %p90
      %p97 = scmp.eq.s32.totalorder %s13, 3
      %p98 = por %p96, %p97
      %p99 = scmp.ne.s32.totalorder %s91, %s94
      %p100 = scmp.eq.s32.totalorder %s13, 0
      %p101 = por %p99, %p100
      %p102 = scmp.ne.s32.totalorder %s91, %s94
      %p103 = scmp.eq.s32.totalorder %s18, 3
      %p104 = por %p102, %p103
      %p105 = scmp.ne.s32.totalorder %s94, %s95
      %p106 = scmp.eq.s32.totalorder %s18, 0
      %p107 = por %p105, %p106
      %p108 = scmp.ne.s32.totalorder %s94, %s95
      %p109 = scmp.eq.s32.totalorder %s19, 3
      %p110 = por %p108, %p109
      %p112 = scmp.ne.s32.totalorder %s95, %s111
      %p113 = scmp.eq.s32.totalorder %s19, 0
      %p114 = por %p112, %p113
      %s115 = ssub.s32 %s13, %s20
      %p116 = scmp.eq.s32.totalorder %s115, 0
      %s118 = sadd.s32 %s117, 1
      %s119 = scalar_select %p116, %s117, %s118
      %p122 = pneg %p116
      %p123 = scmp.eq.s32.totalorder %s13, 3
      %p124 = por %p122, %p123
      %p125 = scmp.ne.s32.totalorder %s117, %s120
      %p126 = scmp.eq.s32.totalorder %s13, 0
      %p127 = por %p125, %p126
      %p128 = scmp.ne.s32.totalorder %s117, %s120
      %p129 = scmp.eq.s32.totalorder %s18, 3
      %p130 = por %p128, %p129
      %p131 = scmp.ne.s32.totalorder %s120, %s121
      %p132 = scmp.eq.s32.totalorder %s18, 0
      %p133 = por %p131, %p132
      %p134 = scmp.ne.s32.totalorder %s120, %s121
      %p135 = scmp.eq.s32.totalorder %s19, 3
      %p136 = por %p134, %p135
      %p138 = scmp.ne.s32.totalorder %s121, %s137
      %p139 = scmp.eq.s32.totalorder %s19, 0
      %p140 = por %p138, %p139
      %p141 = scmp.le.s32.totalorder 1, %s13
      %p142 = scmp.lt.s32.totalorder %s13, 5
      %p143 = pnand %p141, %p142
      %p144 = pneg %p143
      // Predicated region
      $region9: #{_lambda_.5} parent=5 // pred_check
        _
      $region10: #{_lambda_.5} parent=5 // pred_check_branch
        %146 = sbr.rel (%p143) target = $region12
      $region11: #{_lambda_.5} parent=5 // pred_region
        %s147 = ssub.s32 %s13, 1
        // Predicated region
        $region13: #{_lambda_.5} parent=11 // pred_check
          %p148 = pneg %p60
        $region14: #{_lambda_.5} parent=11 // pred_check_branch
          %150 = sbr.rel (%p148) target = $region16
        $region15: #{_lambda_.5} parent=11 // pred_region
          _
        $region16: #{_lambda_.5} parent=11 // pred_fallthru
          _
        // Predicated region
        $region17: #{_lambda_.5} parent=11 // pred_check
          %p151 = pneg %p81
        $region18: #{_lambda_.5} parent=11 // pred_check_branch
          %153 = sbr.rel (%p151) target = $region20
        $region19: #{_lambda_.5} parent=11 // pred_region
          _
        $region20: #{_lambda_.5} parent=11 // pred_fallthru
          _
      $region12: #{_lambda_.5} parent=5 // pred_fallthru
        _
      %p154 = scmp.lt.s32.totalorder %s13, 4
      // Predicated region
      $region21: #{_lambda_.5} parent=5 // pred_check
        %p155 = pneg %p154
      $region22: #{_lambda_.5} parent=5 // pred_check_branch
        %157 = sbr.rel (%p155) target = $region24
      $region23: #{_lambda_.5} parent=5 // pred_region
        // Predicated region
        $region25: #{_lambda_.5} parent=23 // pred_check
          %p158 = pneg %p33
        $region26: #{_lambda_.5} parent=23 // pred_check_branch
          %160 = sbr.rel (%p158) target = $region28
        $region27: #{_lambda_.5} parent=23 // pred_region
          %s161 = smul.u32 16, %s13
          %p162 = scmp.lt.s32.totalorder %s161, 63
          %s163 = scalar_select %p162, %s161, 63
          %s164 = smul.addr %s163, 4
          %s165 = scalar_lea.vmem %s0, %s164
          %s166 = smul.u32 16, %s13
        $region28: #{_lambda_.5} parent=23 // pred_fallthru
          _
        // Predicated region
        $region29: #{_lambda_.5} parent=23 // pred_check
          %p167 = pneg %p101
        $region30: #{_lambda_.5} parent=23 // pred_check_branch
          %169 = sbr.rel (%p167) target = $region32
        $region31: #{_lambda_.5} parent=23 // pred_region
          %s170 = smul.u32 16, %s13
          %p171 = scmp.lt.s32.totalorder %s170, 63
          %s172 = scalar_select %p171, %s170, 63
          %s173 = smul.addr %s172, 8
          %s174 = scalar_lea.vmem %s3, %s173
          %s175 = smul.u32 16, %s13
        $region32: #{_lambda_.5} parent=23 // pred_fallthru
          _
      $region24: #{_lambda_.5} parent=5 // pred_fallthru
        _
      %p176 = scmp.le.s32.totalorder 1, %s13
      %p177 = scmp.lt.s32.totalorder %s13, 5
      %p178 = pnand %p176, %p177
      %p179 = pneg %p178
      // Predicated region
      $region33: #{_lambda_.5} parent=5 // pred_check
        _
      $region34: #{_lambda_.5} parent=5 // pred_check_branch
        %181 = sbr.rel (%p178) target = $region36
      $region35: #{_lambda_.5} parent=5 // pred_region
        %s182 = ssub.s32 %s13, 1
        %s183 = smul.u32 16, %s18
        %p184 = scmp.lt.s32.totalorder %s183, 63
        %s185 = scalar_select %p184, %s183, 63
        %s186 = smul.addr %s185, 4
        %s187 = scalar_lea.vmem %s0, %s186
        %p188 = pneg %p39
        %p189 = pneg %p36
        %p190 = pneg %p60
        %p191 = pneg %p57
        %p192 = pneg %p81
        %p193 = pneg %p78
        %s194 = smul.u32 16, %s18
        %p195 = scmp.lt.s32.totalorder %s194, 63
        %s196 = scalar_select %p195, %s194, 63
        %s197 = smul.addr %s196, 8
        %s198 = scalar_lea.vmem %s3, %s197
        %p199 = pneg %p107
        %p200 = pneg %p104
        %p201 = pneg %p133
        %p202 = pneg %p130
        %s203 = sand.u32 %s120, 1
        %s204 = scalar_lea.sflag [#allocation3], %s203
        %s205 = sand.u32 %s120, 1
        %s206 = smul.addr %s205, 128
        %s207 = scalar_lea.vmem [#allocation2], %s206
        %s208 = smul.u32 16, %s18
        %p209 = scmp.lt.s32.totalorder %s208, 63
        %s210 = scalar_select %p209, %s208, 63
        %s211 = smul.addr %s210, 4
        %s212 = scalar_lea.vmem %s0, %s211
        %s213 = smul.u32 16, %s18
        %s214 = smul.u32 16, %s18
        %p215 = scmp.lt.s32.totalorder %s214, 63
        %s216 = scalar_select %p215, %s214, 63
        %s217 = smul.addr %s216, 8
        %s218 = scalar_lea.vmem %s3, %s217
        %s219 = smul.u32 16, %s18
        %s220 = smul.u32 16, %s18
        %v222 = vld [vmem:[%s212] sm:$0xf]
        %v223 = vld [vmem:[%s212 + $0x4] sm:$0xf]
        %v224 = vld [vmem:[%s212 + $0x8] sm:$0xf]
        %v225 = vld [vmem:[%s212 + $0xc] sm:$0xf]
        %v226 = vld [vmem:[%s212 + $0x10] sm:$0xf]
        %v227 = vld [vmem:[%s212 + $0x14] sm:$0xf]
        %v228 = vld [vmem:[%s212 + $0x18] sm:$0xf]
        %v229 = vld [vmem:[%s212 + $0x1c] sm:$0xf]
        %v230 = vld [vmem:[%s212 + $0x20] sm:$0xf]
        %v231 = vld [vmem:[%s212 + $0x24] sm:$0xf]
        %v232 = vld [vmem:[%s212 + $0x28] sm:$0xf]
        %v233 = vld [vmem:[%s212 + $0x2c] sm:$0xf]
        %v234 = vld [vmem:[%s212 + $0x30] sm:$0xf]
        %v235 = vld [vmem:[%s212 + $0x34] sm:$0xf]
        %v236 = vld [vmem:[%s212 + $0x38] sm:$0xf]
        %v237 = vld [vmem:[%s212 + $0x3c] sm:$0xf]
        %v238 = vld [vmem:[%s1] sm:$0xf]
        %v239 = vld [vmem:[%s1 + $0x4] sm:$0xf]
        %v240 = vld [vmem:[%s2] sm:$0x1]
        %v242 = vlaneseq
        %v243 = vshrl.u32 %v242, 7
        %v244 = vsub.s32 0, %v243
        %v245 = vrot.slane %v240, %v244
        %v263 = vunpack.c.l.b16 %v222
        %v264 = vunpack.c.l.b16 %v223
        %v265 = vunpack.c.l.b16 %v224
        %v266 = vunpack.c.l.b16 %v225
        %v267 = vunpack.c.l.b16 %v226
        %v268 = vunpack.c.l.b16 %v227
        %v269 = vunpack.c.l.b16 %v228
        %v270 = vunpack.c.l.b16 %v229
        %v271 = vunpack.c.l.b16 %v230
        %v272 = vunpack.c.l.b16 %v231
        %v273 = vunpack.c.l.b16 %v232
        %v274 = vunpack.c.l.b16 %v233
        %v275 = vunpack.c.l.b16 %v234
        %v276 = vunpack.c.l.b16 %v235
        %v277 = vunpack.c.l.b16 %v236
        %v278 = vunpack.c.l.b16 %v237
        %v279 = vpack.c.b16 %v264, %v263
        %v280 = vpack.c.b16 %v266, %v265
        %v281 = vpack.c.b16 %v268, %v267
        %v282 = vpack.c.b16 %v270, %v269
        %v283 = vpack.c.b16 %v272, %v271
        %v284 = vpack.c.b16 %v274, %v273
        %v285 = vpack.c.b16 %v276, %v275
        %v286 = vpack.c.b16 %v278, %v277
        %v289 = vunpack.c.l.b16 %v238
        %v290 = vunpack.c.l.b16 %v239
        %v291 = vpack.c.b16 %v290, %v289
        %vm293 = vcmask 130048
        %v295 = vsel %vm293, %v279, 0
        %v298 = vsel %vm293, %v280, 0
        %v301 = vsel %vm293, %v281, 0
        %v304 = vsel %vm293, %v282, 0
        %v307 = vsel %vm293, %v283, 0
        %v310 = vsel %vm293, %v284, 0
        %v313 = vsel %vm293, %v285, 0
        %v316 = vsel %vm293, %v286, 0
        %318 = vmatprep.subr.bf16.mxu0 0
        %319 = vmatpush1.bf16.msra.mxu0 %v291
        %320 = vmatprep.subr.bf16.mxu0 0
        %321 = vmatpush1.bf16.msra.mxu0 0
        %322 = vmatprep.subr.bf16.mxu0 0
        %323 = vmatpush1.bf16.msra.mxu0 0
        %324 = vmatprep.subr.bf16.mxu0 0
        %325 = vmatpush1.bf16.msra.mxu0 0
        %326 = vmatprep.subr.bf16.mxu0 0
        %327 = vmatpush1.bf16.msra.mxu0 0
        %328 = vmatprep.subr.bf16.mxu0 0
        %329 = vmatpush1.bf16.msra.mxu0 0
        %330 = vmatprep.subr.bf16.mxu0 0
        %331 = vmatpush1.bf16.msra.mxu0 0
        %332 = vmatprep.subr.bf16.mxu0 0
        %333 = vmatpush1.bf16.msra.mxu0 0
        %334 = vmatprep.subr.bf16.mxu0 0
        %335 = vmatpush1.bf16.msra.mxu0 0
        %336 = vmatprep.subr.bf16.mxu0 0
        %337 = vmatpush1.bf16.msra.mxu0 0
        %338 = vmatprep.subr.bf16.mxu0 0
        %339 = vmatpush1.bf16.msra.mxu0 0
        %340 = vmatprep.subr.bf16.mxu0 0
        %341 = vmatpush1.bf16.msra.mxu0 0
        %342 = vmatprep.subr.bf16.mxu0 0
        %343 = vmatpush1.bf16.msra.mxu0 0
        %344 = vmatprep.subr.bf16.mxu0 0
        %345 = vmatpush1.bf16.msra.mxu0 0
        %346 = vmatprep.subr.bf16.mxu0 0
        %347 = vmatpush1.bf16.msra.mxu0 0
        %348 = vmatprep.subr.bf16.mxu0 0
        %349 = vmatpush1.bf16.msra.mxu0 0
        %350 = vmatprep.mubr.bf16.mxu0 0
        %351 = vmatmul.mubr.bf16.gmra.mrb[0].mxu0 %v295
        %v352 = vpop.f32.mrb[0].mxu0
        %v353 = vadd.f32 %v245, %v352
        %v354 = vpop.f32.mrb[0].mxu0
        %v355 = vpop.f32.mrb[0].mxu0
        %v356 = vadd.f32 %v245, %v355
        %v357 = vpop.f32.mrb[0].mxu0
        %358 = vmatprep.mubr.bf16.mxu0 0
        %359 = vmatmul.mubr.bf16.gmra.mrb[0].mxu0 %v298
        %v360 = vpop.f32.mrb[0].mxu0
        %v361 = vadd.f32 %v245, %v360
        %v362 = vpop.f32.mrb[0].mxu0
        %v363 = vpop.f32.mrb[0].mxu0
        %v364 = vadd.f32 %v245, %v363
        %v365 = vpop.f32.mrb[0].mxu0
        %366 = vmatprep.mubr.bf16.mxu0 0
        %367 = vmatmul.mubr.bf16.gmra.mrb[0].mxu0 %v301
        %v368 = vpop.f32.mrb[0].mxu0
        %v369 = vadd.f32 %v245, %v368
        %v370 = vpop.f32.mrb[0].mxu0
        %v371 = vpop.f32.mrb[0].mxu0
        %v372 = vadd.f32 %v245, %v371
        %v373 = vpop.f32.mrb[0].mxu0
        %374 = vmatprep.mubr.bf16.mxu0 0
        %375 = vmatmul.mubr.bf16.gmra.mrb[0].mxu0 %v304
        %v376 = vpop.f32.mrb[0].mxu0
        %v377 = vadd.f32 %v245, %v376
        %v378 = vpop.f32.mrb[0].mxu0
        %v379 = vpop.f32.mrb[0].mxu0
        %v380 = vadd.f32 %v245, %v379
        %v381 = vpop.f32.mrb[0].mxu0
        %382 = vmatprep.mubr.bf16.mxu0 0
        %383 = vmatmul.mubr.bf16.gmra.mrb[0].mxu0 %v307
        %v384 = vpop.f32.mrb[0].mxu0
        %v385 = vadd.f32 %v245, %v384
        %v386 = vpop.f32.mrb[0].mxu0
        %v387 = vpop.f32.mrb[0].mxu0
        %v388 = vadd.f32 %v245, %v387
        %v389 = vpop.f32.mrb[0].mxu0
        %390 = vmatprep.mubr.bf16.mxu0 0
        %391 = vmatmul.mubr.bf16.gmra.mrb[0].mxu0 %v310
        %v392 = vpop.f32.mrb[0].mxu0
        %v393 = vadd.f32 %v245, %v392
        %v394 = vpop.f32.mrb[0].mxu0
        %v395 = vpop.f32.mrb[0].mxu0
        %v396 = vadd.f32 %v245, %v395
        %v397 = vpop.f32.mrb[0].mxu0
        %398 = vmatprep.mubr.bf16.mxu0 0
        %399 = vmatmul.mubr.bf16.gmra.mrb[0].mxu0 %v313
        %v400 = vpop.f32.mrb[0].mxu0
        %v401 = vadd.f32 %v245, %v400
        %v402 = vpop.f32.mrb[0].mxu0
        %v403 = vpop.f32.mrb[0].mxu0
        %v404 = vadd.f32 %v245, %v403
        %v405 = vpop.f32.mrb[0].mxu0
        %406 = vmatprep.mubr.bf16.mxu0 0
        %407 = vmatmul.mubr.bf16.gmra.mrb[0].mxu0 %v316
        %v408 = vpop.f32.mrb[0].mxu0
        %v409 = vadd.f32 %v245, %v408
        %v410 = vpop.f32.mrb[0].mxu0
        %v411 = vpop.f32.mrb[0].mxu0
        %v412 = vadd.f32 %v245, %v411
        %v413 = vpop.f32.mrb[0].mxu0
        %414 = vdwg.mxu0
        %v415 = vld [vmem:[%s218] sm:$0xff]
        %v416 = vld [vmem:[%s218 + $0x8] sm:$0xff]
        %v417 = vld [vmem:[%s218 + $0x10] sm:$0xff]
        %v418 = vld [vmem:[%s218 + $0x18] sm:$0xff]
        %v419 = vld [vmem:[%s218 + $0x20] sm:$0xff]
        %v420 = vld [vmem:[%s218 + $0x28] sm:$0xff]
        %v421 = vld [vmem:[%s218 + $0x30] sm:$0xff]
        %v422 = vld [vmem:[%s218 + $0x38] sm:$0xff]
        %v423 = vld [vmem:[%s218 + $0x40] sm:$0xff]
        %v424 = vld [vmem:[%s218 + $0x48] sm:$0xff]
        %v425 = vld [vmem:[%s218 + $0x50] sm:$0xff]
        %v426 = vld [vmem:[%s218 + $0x58] sm:$0xff]
        %v427 = vld [vmem:[%s218 + $0x60] sm:$0xff]
        %v428 = vld [vmem:[%s218 + $0x68] sm:$0xff]
        %v429 = vld [vmem:[%s218 + $0x70] sm:$0xff]
        %v430 = vld [vmem:[%s218 + $0x78] sm:$0xff]
        %v431 = vadd.f32 %v353, %v415
        %v432 = vadd.f32 %v356, %v416
        %v433 = vadd.f32 %v361, %v417
        %v434 = vadd.f32 %v364, %v418
        %v435 = vadd.f32 %v369, %v419
        %v436 = vadd.f32 %v372, %v420
        %v437 = vadd.f32 %v377, %v421
        %v438 = vadd.f32 %v380, %v422
        %v439 = vadd.f32 %v385, %v423
        %v440 = vadd.f32 %v388, %v424
        %v441 = vadd.f32 %v393, %v425
        %v442 = vadd.f32 %v396, %v426
        %v443 = vadd.f32 %v401, %v427
        %v444 = vadd.f32 %v404, %v428
        %v445 = vadd.f32 %v409, %v429
        %v446 = vadd.f32 %v412, %v430
        %v447 = vmax.f32 %v431, 0.0
        %v448 = vmax.f32 %v432, 0.0
        %v449 = vmax.f32 %v433, 0.0
        %v450 = vmax.f32 %v434, 0.0
        %v451 = vmax.f32 %v435, 0.0
        %v452 = vmax.f32 %v436, 0.0
        %v453 = vmax.f32 %v437, 0.0
        %v454 = vmax.f32 %v438, 0.0
        %v455 = vmax.f32 %v439, 0.0
        %v456 = vmax.f32 %v440, 0.0
        %v457 = vmax.f32 %v441, 0.0
        %v458 = vmax.f32 %v442, 0.0
        %v459 = vmax.f32 %v443, 0.0
        %v460 = vmax.f32 %v444, 0.0
        %v461 = vmax.f32 %v445, 0.0
        %v462 = vmax.f32 %v446, 0.0
        %vm463 = vcmask 523264
        %464 = vst.msk [vmem:[%s207] sm:$0xff] %vm463, %v447
        %465 = vst.msk [vmem:[%s207 + $0x8] sm:$0xff] %vm463, %v448
        %466 = vst.msk [vmem:[%s207 + $0x10] sm:$0xff] %vm463, %v449
        %467 = vst.msk [vmem:[%s207 + $0x18] sm:$0xff] %vm463, %v450
        %468 = vst.msk [vmem:[%s207 + $0x20] sm:$0xff] %vm463, %v451
        %469 = vst.msk [vmem:[%s207 + $0x28] sm:$0xff] %vm463, %v452
        %470 = vst.msk [vmem:[%s207 + $0x30] sm:$0xff] %vm463, %v453
        %471 = vst.msk [vmem:[%s207 + $0x38] sm:$0xff] %vm463, %v454
        %472 = vst.msk [vmem:[%s207 + $0x40] sm:$0xff] %vm463, %v455
        %473 = vst.msk [vmem:[%s207 + $0x48] sm:$0xff] %vm463, %v456
        %474 = vst.msk [vmem:[%s207 + $0x50] sm:$0xff] %vm463, %v457
        %475 = vst.msk [vmem:[%s207 + $0x58] sm:$0xff] %vm463, %v458
        %476 = vst.msk [vmem:[%s207 + $0x60] sm:$0xff] %vm463, %v459
        %477 = vst.msk [vmem:[%s207 + $0x68] sm:$0xff] %vm463, %v460
        %478 = vst.msk [vmem:[%s207 + $0x70] sm:$0xff] %vm463, %v461
        %479 = vst.msk [vmem:[%s207 + $0x78] sm:$0xff] %vm463, %v462
        %s480 = sand.u32 %s120, 1
        %s481 = scalar_lea.sflag [#allocation3], %s480
        %s482 = sand.u32 %s120, 1
        %s483 = smul.addr %s482, 128
        %s484 = scalar_lea.vmem [#allocation2], %s483
        // Predicated region
        $region37: #{_lambda_.5} parent=35 // pred_check
          %p485 = pneg %p130
        $region38: #{_lambda_.5} parent=35 // pred_check_branch
          %487 = sbr.rel (%p485) target = $region40
        $region39: #{_lambda_.5} parent=35 // pred_region
          %s488 = smul.u32 16, %s18
          %s490 = ssub.s32 2048, 2048
          %491 = vsyncadd %s481, %s490
          %s492 = smul.addr %s488, 128
          %s493 = scalar_lea.hbm %s4, %s492
          %s494 = sshll.u32 %s484, 4
          %s495 = int_to_ptr.vmem [resolvable:$true] %s494
          %500 = dma.vmem_to_hbm [thread:$0]  %s495, 2048, %s493, %s481, 128, 128, 8
        $region40: #{_lambda_.5} parent=35 // pred_fallthru
          _
      $region36: #{_lambda_.5} parent=5 // pred_fallthru
        _
      %p501 = scmp.le.s32.totalorder 2, %s13
      // Predicated region
      $region41: #{_lambda_.5} parent=5 // pred_check
        %p502 = pneg %p501
      $region42: #{_lambda_.5} parent=5 // pred_check_branch
        %504 = sbr.rel (%p502) target = $region44
      $region43: #{_lambda_.5} parent=5 // pred_region
        %s505 = ssub.s32 %s13, 2
        // Predicated region
        $region45: #{_lambda_.5} parent=43 // pred_check
          %p506 = pneg %p136
        $region46: #{_lambda_.5} parent=43 // pred_check_branch
          %508 = sbr.rel (%p506) target = $region48
        $region47: #{_lambda_.5} parent=43 // pred_region
          %s509 = sand.u32 %s121, 1
          %s510 = scalar_lea.sflag [#allocation3], %s509
          %s511 = sand.u32 %s121, 1
          %s512 = smul.addr %s511, 128
          %s513 = scalar_lea.vmem [#allocation2], %s512
          %514 = dma.done %s510, 2048
        $region48: #{_lambda_.5} parent=43 // pred_fallthru
          _
      $region44: #{_lambda_.5} parent=5 // pred_fallthru
        _
    $region6: #{_lambda_.5} parent=1 // loop_footer
      %s17 = sadd.s32 1, %s13
    $region7: #{_lambda_.5} parent=1 // loop_footer_branch
      %12 = sbr.rel target = $region3
    $region8: #{_lambda_.5} parent=1 // loop_exit
      _
    %515 = vsyncpa [#allocation3], 1
    %s516 = scalar_lea.sflag [#allocation3], 1
    %517 = vsyncpa %s516, 1

// kernel: _lambda_.4
$region0: #{_lambda_.4}
  #allocation0 [shape = 'u32[]', space=smem, size = 0x4, offset = 0x4, fixed_abs, tag = 'smem constant byte address 0x4 - core index']
  #allocation1 [shape = 'u32[144,128]{1,0:T(1,128)}', space=vmem, size = 0x12000, scoped, tag = 'internal scratch']
  %s0 = inlined_call_operand.vmem [shape: bf16[2,2,1,10,18,16], index: 0, kind: input, shape index: {}]
  %s1 = inlined_call_operand.vmem [shape: bf16[144,16], index: 1, kind: input, shape index: {}]
  %s2 = inlined_call_operand.vmem [shape: f32[1,16], index: 2, kind: input, shape index: {}]
  %s3 = inlined_call_operand.vmem [shape: bf16[2,16,16,16], index: 3, kind: output, shape index: {}]
  %s4 = sld [smem:[#allocation0]]
  $region45: #{_lambda_.4} parent=0
    _
  %s6 = ssub.s32 1, %s4
  %s7 = scalar_select 0, %s6, %s4
  loop: start=0, step=1, limit=6
  $region2: #{_lambda_.4} parent=0 // loop_pre_header
    _
  $region3: #{_lambda_.4} parent=0 // loop_header
    %s9 = sphi 0, %s13
    %p10 = scmp.ge.s32.totalorder %s9, 6
    %s16 = sphi 0, %s28
    %s17 = sphi 0, %s24
    %s18 = sphi 0, %s16
    %s19 = sphi 0, %s17
    %s20 = sphi 0, %s18
    %s21 = sphi 0, %s19
    %s33 = sphi 0, %s35
    %s36 = sphi 0, %s33
    %s37 = sphi 0, %s36
    %s53 = sphi 0, %s37
    %s57 = sphi 0, %s57
    %s59 = sphi 0, %s57
    %s60 = sphi 0, %s59
    %s74 = sphi 0, %s60
    %s78 = sphi 0, %s78
    %s80 = sphi 0, %s78
    %s81 = sphi 0, %s80
    %s95 = sphi 0, %s81
    %s103 = sphi 0, %s105
    %s106 = sphi 0, %s103
    %s107 = sphi 0, %s106
    %s123 = sphi 0, %s107
  $region4: #{_lambda_.4} parent=0 // loop_header_branch
    %12 = sbr.rel (%p10) target = $region8
  $region5: #{_lambda_.4} parent=0 // loop_body
    %s14 = ssub.s32 %s9, 1
    %s15 = ssub.s32 %s9, 2
    %s22 = sadd.s32 1, %s17
    %p23 = scmp.ge.s32.totalorder %s22, 2
    %s24 = scalar_select %p23, 0, %s22
    %s25 = sadd.s32 1, %s16
    %s26 = scalar_select %p23, %s25, %s16
    %p27 = scmp.ge.s32.totalorder %s26, 2
    %s28 = scalar_select %p27, 0, %s26
    %s29 = ssub.s32 %s16, %s28
    %s30 = ssub.s32 %s17, %s24
    %s31 = sor.u32 %s29, %s30
    %p32 = scmp.eq.s32.totalorder %s31, 0
    %s34 = sadd.s32 %s33, 1
    %s35 = scalar_select %p32, %s33, %s34
    %p38 = pneg %p32
    %p39 = scmp.eq.s32.totalorder %s9, 3
    %p40 = por %p38, %p39
    %p41 = scmp.ne.s32.totalorder %s33, %s36
    %p42 = scmp.eq.s32.totalorder %s9, 0
    %p43 = por %p41, %p42
    %p44 = scmp.ne.s32.totalorder %s33, %s36
    %p45 = scmp.eq.s32.totalorder %s14, 3
    %p46 = por %p44, %p45
    %p47 = scmp.ne.s32.totalorder %s36, %s37
    %p48 = scmp.eq.s32.totalorder %s14, 0
    %p49 = por %p47, %p48
    %p50 = scmp.ne.s32.totalorder %s36, %s37
    %p51 = scmp.eq.s32.totalorder %s15, 3
    %p52 = por %p50, %p51
    %p54 = scmp.ne.s32.totalorder %s37, %s53
    %p55 = scmp.eq.s32.totalorder %s15, 0
    %p56 = por %p54, %p55
    %s58 = sadd.s32 %s57, 1
    %p61 = scmp.eq.s32.totalorder %s9, 3
    %p62 = scmp.ne.s32.totalorder %s57, %s59
    %p63 = scmp.eq.s32.totalorder %s9, 0
    %p64 = por %p62, %p63
    %p65 = scmp.ne.s32.totalorder %s57, %s59
    %p66 = scmp.eq.s32.totalorder %s14, 3
    %p67 = por %p65, %p66
    %p68 = scmp.ne.s32.totalorder %s59, %s60
    %p69 = scmp.eq.s32.totalorder %s14, 0
    %p70 = por %p68, %p69
    %p71 = scmp.ne.s32.totalorder %s59, %s60
    %p72 = scmp.eq.s32.totalorder %s15, 3
    %p73 = por %p71, %p72
    %p75 = scmp.ne.s32.totalorder %s60, %s74
    %p76 = scmp.eq.s32.totalorder %s15, 0
    %p77 = por %p75, %p76
    %s79 = sadd.s32 %s78, 1
    %p82 = scmp.eq.s32.totalorder %s9, 3
    %p83 = scmp.ne.s32.totalorder %s78, %s80
    %p84 = scmp.eq.s32.totalorder %s9, 0
    %p85 = por %p83, %p84
    %p86 = scmp.ne.s32.totalorder %s78, %s80
    %p87 = scmp.eq.s32.totalorder %s14, 3
    %p88 = por %p86, %p87
    %p89 = scmp.ne.s32.totalorder %s80, %s81
    %p90 = scmp.eq.s32.totalorder %s14, 0
    %p91 = por %p89, %p90
    %p92 = scmp.ne.s32.totalorder %s80, %s81
    %p93 = scmp.eq.s32.totalorder %s15, 3
    %p94 = por %p92, %p93
    %p96 = scmp.ne.s32.totalorder %s81, %s95
    %p97 = scmp.eq.s32.totalorder %s15, 0
    %p98 = por %p96, %p97
    %s99 = ssub.s32 %s16, %s28
    %s100 = ssub.s32 %s17, %s24
    %s101 = sor.u32 %s99, %s100
    %p102 = scmp.eq.s32.totalorder %s101, 0
    %s104 = sadd.s32 %s103, 1
    %s105 = scalar_select %p102, %s103, %s104
    %p108 = pneg %p102
    %p109 = scmp.eq.s32.totalorder %s9, 3
    %p110 = por %p108, %p109
    %p111 = scmp.ne.s32.totalorder %s103, %s106
    %p112 = scmp.eq.s32.totalorder %s9, 0
    %p113 = por %p111, %p112
    %p114 = scmp.ne.s32.totalorder %s103, %s106
    %p115 = scmp.eq.s32.totalorder %s14, 3
    %p116 = por %p114, %p115
    %p117 = scmp.ne.s32.totalorder %s106, %s107
    %p118 = scmp.eq.s32.totalorder %s14, 0
    %p119 = por %p117, %p118
    %p120 = scmp.ne.s32.totalorder %s106, %s107
    %p121 = scmp.eq.s32.totalorder %s15, 3
    %p122 = por %p120, %p121
    %p124 = scmp.ne.s32.totalorder %s107, %s123
    %p125 = scmp.eq.s32.totalorder %s15, 0
    %p126 = por %p124, %p125
    %p127 = scmp.le.s32.totalorder 1, %s9
    %p128 = scmp.lt.s32.totalorder %s9, 5
    %p129 = pnand %p127, %p128
    %p130 = pneg %p129
    // Predicated region
    $region9: #{_lambda_.4} parent=5 // pred_check
      _
    $region10: #{_lambda_.4} parent=5 // pred_check_branch
      %132 = sbr.rel (%p129) target = $region12
    $region11: #{_lambda_.4} parent=5 // pred_region
      %s133 = ssub.s32 %s9, 1
      // Predicated region
      $region13: #{_lambda_.4} parent=11 // pred_check
        %p134 = pneg %p70
      $region14: #{_lambda_.4} parent=11 // pred_check_branch
        %136 = sbr.rel (%p134) target = $region16
      $region15: #{_lambda_.4} parent=11 // pred_region
        _
      $region16: #{_lambda_.4} parent=11 // pred_fallthru
        _
      // Predicated region
      $region17: #{_lambda_.4} parent=11 // pred_check
        %p137 = pneg %p91
      $region18: #{_lambda_.4} parent=11 // pred_check_branch
        %139 = sbr.rel (%p137) target = $region20
      $region19: #{_lambda_.4} parent=11 // pred_region
        _
      $region20: #{_lambda_.4} parent=11 // pred_fallthru
        _
    $region12: #{_lambda_.4} parent=5 // pred_fallthru
      _
    %p140 = scmp.lt.s32.totalorder %s9, 4
    // Predicated region
    $region21: #{_lambda_.4} parent=5 // pred_check
      %p141 = pneg %p140
    $region22: #{_lambda_.4} parent=5 // pred_check_branch
      %143 = sbr.rel (%p141) target = $region24
    $region23: #{_lambda_.4} parent=5 // pred_region
      // Predicated region
      $region25: #{_lambda_.4} parent=23 // pred_check
        %p144 = pneg %p43
      $region26: #{_lambda_.4} parent=23 // pred_check_branch
        %146 = sbr.rel (%p144) target = $region28
      $region27: #{_lambda_.4} parent=23 // pred_region
        %p147 = scmp.lt.s32.totalorder %s16, 1
        %s148 = scalar_select %p147, %s16, 1
        %p149 = scmp.lt.s32.totalorder %s17, 1
        %s150 = scalar_select %p149, %s17, 1
        %s151 = smul.addr %s150, 30
        %s152 = smul.addr %s148, 60
        %s153 = sadd.s32 %s151, %s152
        %s154 = smul.addr %s153, 4
        %s155 = scalar_lea.vmem %s0, %s154
      $region28: #{_lambda_.4} parent=23 // pred_fallthru
        _
    $region24: #{_lambda_.4} parent=5 // pred_fallthru
      _
    %p156 = scmp.le.s32.totalorder 1, %s9
    %p157 = scmp.lt.s32.totalorder %s9, 5
    %p158 = pnand %p156, %p157
    %p159 = pneg %p158
    // Predicated region
    $region29: #{_lambda_.4} parent=5 // pred_check
      _
    $region30: #{_lambda_.4} parent=5 // pred_check_branch
      %161 = sbr.rel (%p158) target = $region32
    $region31: #{_lambda_.4} parent=5 // pred_region
      %s162 = ssub.s32 %s9, 1
      %p163 = scmp.lt.s32.totalorder %s18, 1
      %s164 = scalar_select %p163, %s18, 1
      %p165 = scmp.lt.s32.totalorder %s19, 1
      %s166 = scalar_select %p165, %s19, 1
      %s167 = smul.addr %s166, 30
      %s168 = smul.addr %s164, 60
      %s169 = sadd.s32 %s167, %s168
      %s170 = smul.addr %s169, 4
      %s171 = scalar_lea.vmem %s0, %s170
      %p172 = pneg %p49
      %p173 = pneg %p46
      %p174 = pneg %p70
      %p175 = pneg %p67
      %p176 = pneg %p91
      %p177 = pneg %p88
      %p178 = pneg %p119
      %p179 = pneg %p116
      %s180 = smul.u32 8, %s19
      %p181 = scmp.lt.s32.totalorder %s18, 1
      %s182 = scalar_select %p181, %s18, 1
      %p183 = scmp.lt.s32.totalorder %s180, 15
      %s184 = scalar_select %p183, %s180, 15
      %s185 = smul.addr %s184, 2
      %s186 = smul.addr %s182, 32
      %s187 = sadd.s32 %s185, %s186
      %s188 = smul.addr %s187, 4
      %s189 = scalar_lea.vmem %s3, %s188
      %p190 = scmp.lt.s32.totalorder %s18, 1
      %s191 = scalar_select %p190, %s18, 1
      %p192 = scmp.lt.s32.totalorder %s19, 1
      %s193 = scalar_select %p192, %s19, 1
      %s194 = smul.addr %s193, 30
      %s195 = smul.addr %s191, 60
      %s196 = sadd.s32 %s194, %s195
      %s197 = smul.addr %s196, 4
      %s198 = scalar_lea.vmem %s0, %s197
      %s199 = smul.u32 8, %s19
      %p200 = scmp.lt.s32.totalorder %s18, 1
      %s201 = scalar_select %p200, %s18, 1
      %p202 = scmp.lt.s32.totalorder %s199, 15
      %s203 = scalar_select %p202, %s199, 15
      %s204 = smul.addr %s203, 2
      %s205 = smul.addr %s201, 32
      %s206 = sadd.s32 %s204, %s205
      %s207 = smul.addr %s206, 4
      %s208 = scalar_lea.vmem %s3, %s207
      %s209 = smul.u32 8, %s19
      %v211 = vld [vmem:[%s198] sm:$0xf]
      %v212 = vld [vmem:[%s198 + $0x4] sm:$0xf]
      %v213 = vld [vmem:[%s198 + $0x8] sm:$0x1]
      %v214 = vld [vmem:[%s198 + $0xc] sm:$0xf]
      %v215 = vld [vmem:[%s198 + $0x10] sm:$0xf]
      %v216 = vld [vmem:[%s198 + $0x14] sm:$0x1]
      %v217 = vld [vmem:[%s198 + $0x18] sm:$0xf]
      %v218 = vld [vmem:[%s198 + $0x1c] sm:$0xf]
      %v219 = vld [vmem:[%s198 + $0x20] sm:$0x1]
      %v220 = vld [vmem:[%s198 + $0x24] sm:$0xf]
      %v221 = vld [vmem:[%s198 + $0x28] sm:$0xf]
      %v222 = vld [vmem:[%s198 + $0x2c] sm:$0x1]
      %v223 = vld [vmem:[%s198 + $0x30] sm:$0xf]
      %v224 = vld [vmem:[%s198 + $0x34] sm:$0xf]
      %v225 = vld [vmem:[%s198 + $0x38] sm:$0x1]
      %v226 = vld [vmem:[%s198 + $0x3c] sm:$0xf]
      %v227 = vld [vmem:[%s198 + $0x40] sm:$0xf]
      %v228 = vld [vmem:[%s198 + $0x44] sm:$0x1]
      %v229 = vld [vmem:[%s198 + $0x48] sm:$0xf]
      %v230 = vld [vmem:[%s198 + $0x4c] sm:$0xf]
      %v231 = vld [vmem:[%s198 + $0x50] sm:$0x1]
      %v232 = vld [vmem:[%s198 + $0x54] sm:$0xf]
      %v233 = vld [vmem:[%s198 + $0x58] sm:$0xf]
      %v234 = vld [vmem:[%s198 + $0x5c] sm:$0x1]
      %v235 = vld [vmem:[%s198 + $0x60] sm:$0xf]
      %v236 = vld [vmem:[%s198 + $0x64] sm:$0xf]
      %v237 = vld [vmem:[%s198 + $0x68] sm:$0x1]
      %v238 = vld [vmem:[%s198 + $0x6c] sm:$0xf]
      %v239 = vld [vmem:[%s198 + $0x70] sm:$0xf]
      %v240 = vld [vmem:[%s198 + $0x74] sm:$0x1]
      %v257 = vunpack.c.l.b16 %v211
      %v258 = vunpack.c.l.b16 %v212
      %v259 = vunpack.c.l.b16 %v214
      %v260 = vunpack.c.l.b16 %v215
      %v261 = vunpack.c.l.b16 %v217
      %v262 = vunpack.c.l.b16 %v218
      %v263 = vunpack.c.l.b16 %v220
      %v264 = vunpack.c.l.b16 %v221
      %v265 = vunpack.c.l.b16 %v223
      %v266 = vunpack.c.l.b16 %v224
      %v267 = vunpack.c.l.b16 %v226
      %v268 = vunpack.c.l.b16 %v227
      %v269 = vunpack.c.l.b16 %v229
      %v270 = vunpack.c.l.b16 %v230
      %v271 = vunpack.c.l.b16 %v232
      %v272 = vunpack.c.l.b16 %v233
      %v273 = vpack.c.b16 %v258, %v257
      %v274 = vpack.c.b16 %v260, %v259
      %v275 = vpack.c.b16 %v262, %v261
      %v276 = vpack.c.b16 %v264, %v263
      %v277 = vpack.c.b16 %v266, %v265
      %v278 = vpack.c.b16 %v268, %v267
      %v279 = vpack.c.b16 %v270, %v269
      %v280 = vpack.c.b16 %v272, %v271
      %v289 = vunpack.c.l.b16 %v213
      %v290 = vunpack.c.l.b16 %v216
      %v291 = vunpack.c.l.b16 %v219
      %v292 = vunpack.c.l.b16 %v222
      %v293 = vunpack.c.l.b16 %v225
      %v294 = vunpack.c.l.b16 %v228
      %v295 = vunpack.c.l.b16 %v231
      %v296 = vunpack.c.l.b16 %v234
      %v297 = vpack.c.b16 %v289, %v289
      %v298 = vpack.c.b16 %v290, %v290
      %v299 = vpack.c.b16 %v291, %v291
      %v300 = vpack.c.b16 %v292, %v292
      %v301 = vpack.c.b16 %v293, %v293
      %v302 = vpack.c.b16 %v294, %v294
      %v303 = vpack.c.b16 %v295, %v295
      %v304 = vpack.c.b16 %v296, %v296
      %vm305 = vsmask.f32 7424
      %v307 = vshrl.u32 %v273, 16
      %v309 = vshll.u32 %v273, 16
      %v311 = vrot.slane %v309, 1
      %v312 = vor.u32 %v307, %v311
      %v314 = vshll.u32 %v297, 16
      %v316 = vrot.slane %v314, 1
      %v317 = vsel %vm305, %v312, %v316
      %v319 = vshrl.u32 %v274, 16
      %v321 = vshll.u32 %v274, 16
      %v323 = vrot.slane %v321, 1
      %v324 = vor.u32 %v319, %v323
      %v326 = vshll.u32 %v298, 16
      %v328 = vrot.slane %v326, 1
      %v329 = vsel %vm305, %v324, %v328
      %v331 = vshrl.u32 %v275, 16
      %v333 = vshll.u32 %v275, 16
      %v335 = vrot.slane %v333, 1
      %v336 = vor.u32 %v331, %v335
      %v338 = vshll.u32 %v299, 16
      %v340 = vrot.slane %v338, 1
      %v341 = vsel %vm305, %v336, %v340
      %v343 = vshrl.u32 %v276, 16
      %v345 = vshll.u32 %v276, 16
      %v347 = vrot.slane %v345, 1
      %v348 = vor.u32 %v343, %v347
      %v350 = vshll.u32 %v300, 16
      %v352 = vrot.slane %v350, 1
      %v353 = vsel %vm305, %v348, %v352
      %v355 = vshrl.u32 %v277, 16
      %v357 = vshll.u32 %v277, 16
      %v359 = vrot.slane %v357, 1
      %v360 = vor.u32 %v355, %v359
      %v362 = vshll.u32 %v301, 16
      %v364 = vrot.slane %v362, 1
      %v365 = vsel %vm305, %v360, %v364
      %v367 = vshrl.u32 %v278, 16
      %v369 = vshll.u32 %v278, 16
      %v371 = vrot.slane %v369, 1
      %v372 = vor.u32 %v367, %v371
      %v374 = vshll.u32 %v302, 16
      %v376 = vrot.slane %v374, 1
      %v377 = vsel %vm305, %v372, %v376
      %v379 = vshrl.u32 %v279, 16
      %v381 = vshll.u32 %v279, 16
      %v383 = vrot.slane %v381, 1
      %v384 = vor.u32 %v379, %v383
      %v386 = vshll.u32 %v303, 16
      %v388 = vrot.slane %v386, 1
      %v389 = vsel %vm305, %v384, %v388
      %v391 = vshrl.u32 %v280, 16
      %v393 = vshll.u32 %v280, 16
      %v395 = vrot.slane %v393, 1
      %v396 = vor.u32 %v391, %v395
      %v398 = vshll.u32 %v304, 16
      %v400 = vrot.slane %v398, 1
      %v401 = vsel %vm305, %v396, %v400
      %402 = vrot.lane.b32.xlu0 %v317, 16
      %v403 = vpop.permute.xlu0 %402
      %404 = vrot.lane.b32.xlu0 %v329, 16
      %v405 = vpop.permute.xlu0 %404
      %406 = vrot.lane.b32.xlu0 %v341, 16
      %v407 = vpop.permute.xlu0 %406
      %408 = vrot.lane.b32.xlu0 %v353, 16
      %v409 = vpop.permute.xlu0 %408
      %410 = vrot.lane.b32.xlu0 %v365, 16
      %v411 = vpop.permute.xlu0 %410
      %412 = vrot.lane.b32.xlu0 %v377, 16
      %v413 = vpop.permute.xlu0 %412
      %414 = vrot.lane.b32.xlu0 %v389, 16
      %v415 = vpop.permute.xlu0 %414
      %416 = vrot.lane.b32.xlu0 %v401, 16
      %v417 = vpop.permute.xlu0 %416
      %vm418 = vcmask 1046528
      %v419 = vrot.slane %v273, 1
      %v420 = vrot.slane %v297, 1
      %v421 = vsel %vm418, %v419, %v420
      %v422 = vrot.slane %v274, 1
      %v423 = vrot.slane %v298, 1
      %v424 = vsel %vm418, %v422, %v423
      %v425 = vrot.slane %v275, 1
      %v426 = vrot.slane %v299, 1
      %v427 = vsel %vm418, %v425, %v426
      %v428 = vrot.slane %v276, 1
      %v429 = vrot.slane %v300, 1
      %v430 = vsel %vm418, %v428, %v429
      %v431 = vrot.slane %v277, 1
      %v432 = vrot.slane %v301, 1
      %v433 = vsel %vm418, %v431, %v432
      %v434 = vrot.slane %v278, 1
      %v435 = vrot.slane %v302, 1
      %v436 = vsel %vm418, %v434, %v435
      %v437 = vrot.slane %v279, 1
      %v438 = vrot.slane %v303, 1
      %v439 = vsel %vm418, %v437, %v438
      %v440 = vrot.slane %v280, 1
      %v441 = vrot.slane %v304, 1
      %v442 = vsel %vm418, %v440, %v441
      %443 = vrot.lane.b32.xlu0 %v421, 32
      %v444 = vpop.permute.xlu0 %443
      %445 = vrot.lane.b32.xlu0 %v424, 32
      %v446 = vpop.permute.xlu0 %445
      %447 = vrot.lane.b32.xlu0 %v427, 32
      %v448 = vpop.permute.xlu0 %447
      %449 = vrot.lane.b32.xlu0 %v430, 32
      %v450 = vpop.permute.xlu0 %449
      %451 = vrot.lane.b32.xlu0 %v433, 32
      %v452 = vpop.permute.xlu0 %451
      %453 = vrot.lane.b32.xlu0 %v436, 32
      %v454 = vpop.permute.xlu0 %453
      %455 = vrot.lane.b32.xlu0 %v439, 32
      %v456 = vpop.permute.xlu0 %455
      %457 = vrot.lane.b32.xlu0 %v442, 32
      %v458 = vpop.permute.xlu0 %457
      %v461 = vunpack.c.l.b16 %v235
      %v462 = vunpack.c.l.b16 %v236
      %v463 = vpack.c.b16 %v462, %v461
      %464 = vrot.lane.b32.xlu0 %v274, 48
      %v465 = vpop.permute.xlu0 %464
      %466 = vrot.lane.b32.xlu0 %v275, 48
      %v467 = vpop.permute.xlu0 %466
      %468 = vrot.lane.b32.xlu0 %v276, 48
      %v469 = vpop.permute.xlu0 %468
      %470 = vrot.lane.b32.xlu0 %v277, 48
      %v471 = vpop.permute.xlu0 %470
      %472 = vrot.lane.b32.xlu0 %v278, 48
      %v473 = vpop.permute.xlu0 %472
      %474 = vrot.lane.b32.xlu0 %v279, 48
      %v475 = vpop.permute.xlu0 %474
      %476 = vrot.lane.b32.xlu0 %v280, 48
      %v477 = vpop.permute.xlu0 %476
      %478 = vrot.lane.b32.xlu0 %v463, 48
      %v479 = vpop.permute.xlu0 %478
      %v481 = vunpack.c.l.b16 %v237
      %v482 = vpack.c.b16 %v481, %v481
      %v484 = vshrl.u32 %v463, 16
      %v486 = vshll.u32 %v463, 16
      %v488 = vrot.slane %v486, 1
      %v489 = vor.u32 %v484, %v488
      %v491 = vshll.u32 %v482, 16
      %v493 = vrot.slane %v491, 1
      %v494 = vsel %vm305, %v489, %v493
      %495 = vrot.lane.b32.xlu0 %v329, 64
      %v496 = vpop.permute.xlu0 %495
      %497 = vrot.lane.b32.xlu0 %v341, 64
      %v498 = vpop.permute.xlu0 %497
      %499 = vrot.lane.b32.xlu0 %v353, 64
      %v500 = vpop.permute.xlu0 %499
      %501 = vrot.lane.b32.xlu0 %v365, 64
      %v502 = vpop.permute.xlu0 %501
      %503 = vrot.lane.b32.xlu0 %v377, 64
      %v504 = vpop.permute.xlu0 %503
      %505 = vrot.lane.b32.xlu0 %v389, 64
      %v506 = vpop.permute.xlu0 %505
      %507 = vrot.lane.b32.xlu0 %v401, 64
      %v508 = vpop.permute.xlu0 %507
      %509 = vrot.lane.b32.xlu0 %v494, 64
      %v510 = vpop.permute.xlu0 %509
      %v511 = vrot.slane %v463, 1
      %v512 = vrot.slane %v482, 1
      %v513 = vsel %vm418, %v511, %v512
      %514 = vrot.lane.b32.xlu0 %v424, 80
      %v515 = vpop.permute.xlu0 %514
      %516 = vrot.lane.b32.xlu0 %v427, 80
      %v517 = vpop.permute.xlu0 %516
      %518 = vrot.lane.b32.xlu0 %v430, 80
      %v519 = vpop.permute.xlu0 %518
      %520 = vrot.lane.b32.xlu0 %v433, 80
      %v521 = vpop.permute.xlu0 %520
      %522 = vrot.lane.b32.xlu0 %v436, 80
      %v523 = vpop.permute.xlu0 %522
      %524 = vrot.lane.b32.xlu0 %v439, 80
      %v525 = vpop.permute.xlu0 %524
      %526 = vrot.lane.b32.xlu0 %v442, 80
      %v527 = vpop.permute.xlu0 %526
      %528 = vrot.lane.b32.xlu0 %v513, 80
      %v529 = vpop.permute.xlu0 %528
      %v532 = vunpack.c.l.b16 %v238
      %v533 = vunpack.c.l.b16 %v239
      %v534 = vpack.c.b16 %v533, %v532
      %535 = vrot.lane.b32.xlu0 %v275, 96
      %v536 = vpop.permute.xlu0 %535
      %537 = vrot.lane.b32.xlu0 %v276, 96
      %v538 = vpop.permute.xlu0 %537
      %539 = vrot.lane.b32.xlu0 %v277, 96
      %v540 = vpop.permute.xlu0 %539
      %541 = vrot.lane.b32.xlu0 %v278, 96
      %v542 = vpop.permute.xlu0 %541
      %543 = vrot.lane.b32.xlu0 %v279, 96
      %v544 = vpop.permute.xlu0 %543
      %545 = vrot.lane.b32.xlu0 %v280, 96
      %v546 = vpop.permute.xlu0 %545
      %547 = vrot.lane.b32.xlu0 %v463, 96
      %v548 = vpop.permute.xlu0 %547
      %549 = vrot.lane.b32.xlu0 %v534, 96
      %v550 = vpop.permute.xlu0 %549
      %v552 = vunpack.c.l.b16 %v240
      %v553 = vpack.c.b16 %v552, %v552
      %v555 = vshrl.u32 %v534, 16
      %v557 = vshll.u32 %v534, 16
      %v559 = vrot.slane %v557, 1
      %v560 = vor.u32 %v555, %v559
      %v562 = vshll.u32 %v553, 16
      %v564 = vrot.slane %v562, 1
      %v565 = vsel %vm305, %v560, %v564
      %566 = vrot.lane.b32.xlu0 %v341, 112
      %v567 = vpop.permute.xlu0 %566
      %568 = vrot.lane.b32.xlu0 %v353, 112
      %v569 = vpop.permute.xlu0 %568
      %570 = vrot.lane.b32.xlu0 %v365, 112
      %v571 = vpop.permute.xlu0 %570
      %572 = vrot.lane.b32.xlu0 %v377, 112
      %v573 = vpop.permute.xlu0 %572
      %574 = vrot.lane.b32.xlu0 %v389, 112
      %v575 = vpop.permute.xlu0 %574
      %576 = vrot.lane.b32.xlu0 %v401, 112
      %v577 = vpop.permute.xlu0 %576
      %578 = vrot.lane.b32.xlu0 %v494, 112
      %v579 = vpop.permute.xlu0 %578
      %580 = vrot.lane.b32.xlu0 %v565, 112
      %v581 = vpop.permute.xlu0 %580
      %v582 = vrot.slane %v534, 1
      %v583 = vrot.slane %v553, 1
      %v584 = vsel %vm418, %v582, %v583
      %vm585 = vcmask 130048
      %v587 = vsel %vm585, %v273, %v403
      %v589 = vsel %vm585, %v274, %v405
      %v591 = vsel %vm585, %v275, %v407
      %v593 = vsel %vm585, %v276, %v409
      %v595 = vsel %vm585, %v277, %v411
      %v597 = vsel %vm585, %v278, %v413
      %v599 = vsel %vm585, %v279, %v415
      %v601 = vsel %vm585, %v280, %v417
      %vm602 = vcmask 261120
      %v604 = vsel %vm602, %v587, %v444
      %v606 = vsel %vm602, %v589, %v446
      %v608 = vsel %vm602, %v591, %v448
      %v610 = vsel %vm602, %v593, %v450
      %v612 = vsel %vm602, %v595, %v452
      %v614 = vsel %vm602, %v597, %v454
      %v616 = vsel %vm602, %v599, %v456
      %v618 = vsel %vm602, %v601, %v458
      %vm619 = vcmask 392192
      %v621 = vsel %vm619, %v604, %v465
      %v623 = vsel %vm619, %v606, %v467
      %v625 = vsel %vm619, %v608, %v469
      %v627 = vsel %vm619, %v610, %v471
      %v629 = vsel %vm619, %v612, %v473
      %v631 = vsel %vm619, %v614, %v475
      %v633 = vsel %vm619, %v616, %v477
      %v635 = vsel %vm619, %v618, %v479
      %vm636 = vcmask 523264
      %v638 = vsel %vm636, %v621, %v496
      %v640 = vsel %vm636, %v623, %v498
      %v642 = vsel %vm636, %v625, %v500
      %v644 = vsel %vm636, %v627, %v502
      %v646 = vsel %vm636, %v629, %v504
      %v648 = vsel %vm636, %v631, %v506
      %v650 = vsel %vm636, %v633, %v508
      %v652 = vsel %vm636, %v635, %v510
      %vm653 = vcmask 654336
      %v655 = vsel %vm653, %v638, %v515
      %v657 = vsel %vm653, %v640, %v517
      %v659 = vsel %vm653, %v642, %v519
      %v661 = vsel %vm653, %v644, %v521
      %v663 = vsel %vm653, %v646, %v523
      %v665 = vsel %vm653, %v648, %v525
      %v667 = vsel %vm653, %v650, %v527
      %v669 = vsel %vm653, %v652, %v529
      %vm670 = vcmask 785408
      %v672 = vsel %vm670, %v655, %v536
      %v674 = vsel %vm670, %v657, %v538
      %v676 = vsel %vm670, %v659, %v540
      %v678 = vsel %vm670, %v661, %v542
      %v680 = vsel %vm670, %v663, %v544
      %v682 = vsel %vm670, %v665, %v546
      %v684 = vsel %vm670, %v667, %v548
      %v686 = vsel %vm670, %v669, %v550
      %vm687 = vcmask 916480
      %v689 = vsel %vm687, %v672, %v567
      %v692 = vsel %vm687, %v674, %v569
      %v695 = vsel %vm687, %v676, %v571
      %v698 = vsel %vm687, %v678, %v573
      %v701 = vsel %vm687, %v680, %v575
      %v704 = vsel %vm687, %v682, %v577
      %v707 = vsel %vm687, %v684, %v579
      %v710 = vsel %vm687, %v686, %v581
      %v712 = vld [vmem:[%s1] sm:$0xf]
      %v713 = vld [vmem:[%s1 + $0x4] sm:$0xf]
      %v714 = vld [vmem:[%s1 + $0x8] sm:$0xf]
      %v715 = vld [vmem:[%s1 + $0xc] sm:$0xf]
      %v716 = vld [vmem:[%s1 + $0x10] sm:$0xf]
      %v717 = vld [vmem:[%s1 + $0x14] sm:$0xf]
      %v718 = vld [vmem:[%s1 + $0x18] sm:$0xf]
      %v719 = vld [vmem:[%s1 + $0x1c] sm:$0xf]
      %v720 = vld [vmem:[%s1 + $0x20] sm:$0xf]
      %v721 = vld [vmem:[%s1 + $0x24] sm:$0xf]
      %v722 = vld [vmem:[%s1 + $0x28] sm:$0xf]
      %v723 = vld [vmem:[%s1 + $0x2c] sm:$0xf]
      %v724 = vld [vmem:[%s1 + $0x30] sm:$0xf]
      %v725 = vld [vmem:[%s1 + $0x34] sm:$0xf]
      %v726 = vld [vmem:[%s1 + $0x38] sm:$0xf]
      %v727 = vld [vmem:[%s1 + $0x3c] sm:$0xf]
      %v728 = vld [vmem:[%s1 + $0x40] sm:$0xf]
      %v729 = vld [vmem:[%s1 + $0x44] sm:$0xf]
      %v730 = vld [vmem:[%s2] sm:$0x1]
      %v732 = vlaneseq
      %v733 = vshrl.u32 %v732, 7
      %v734 = vsub.s32 0, %v733
      %v735 = vrot.slane %v730, %v734
      %v755 = vunpack.c.l.b16 %v712
      %v756 = vunpack.c.l.b16 %v713
      %v757 = vunpack.c.l.b16 %v714
      %v758 = vunpack.c.l.b16 %v715
      %v759 = vunpack.c.l.b16 %v716
      %v760 = vunpack.c.l.b16 %v717
      %v761 = vunpack.c.l.b16 %v718
      %v762 = vunpack.c.l.b16 %v719
      %v763 = vunpack.c.l.b16 %v720
      %v764 = vunpack.c.l.b16 %v721
      %v765 = vunpack.c.l.b16 %v722
      %v766 = vunpack.c.l.b16 %v723
      %v767 = vunpack.c.l.b16 %v724
      %v768 = vunpack.c.l.b16 %v725
      %v769 = vunpack.c.l.b16 %v726
      %v770 = vunpack.c.l.b16 %v727
      %v771 = vunpack.c.l.b16 %v728
      %v772 = vunpack.c.l.b16 %v729
      %v773 = vpack.c.b16 %v756, %v755
      %v774 = vpack.c.b16 %v758, %v757
      %v775 = vpack.c.b16 %v760, %v759
      %v776 = vpack.c.b16 %v762, %v761
      %v777 = vpack.c.b16 %v764, %v763
      %v778 = vpack.c.b16 %v766, %v765
      %v779 = vpack.c.b16 %v768, %v767
      %v780 = vpack.c.b16 %v770, %v769
      %v781 = vpack.c.b16 %v772, %v771
      %v792 = vsel %vm585, %v427, 0
      %v795 = vsel %vm585, %v430, 0
      %v798 = vsel %vm585, %v433, 0
      %v801 = vsel %vm585, %v436, 0
      %v804 = vsel %vm585, %v439, 0
      %v807 = vsel %vm585, %v442, 0
      %v810 = vsel %vm585, %v513, 0
      %v813 = vsel %vm585, %v584, 0
      %815 = vmatprep.subr.bf16.mxu0 0
      %816 = vmatpush1.bf16.msra.mxu0 %v773
      %817 = vmatprep.subr.bf16.mxu0 0
      %818 = vmatpush1.bf16.msra.mxu0 %v774
      %819 = vmatprep.subr.bf16.mxu0 0
      %820 = vmatpush1.bf16.msra.mxu0 %v775
      %821 = vmatprep.subr.bf16.mxu0 0
      %822 = vmatpush1.bf16.msra.mxu0 %v776
      %823 = vmatprep.subr.bf16.mxu0 0
      %824 = vmatpush1.bf16.msra.mxu0 %v777
      %825 = vmatprep.subr.bf16.mxu0 0
      %826 = vmatpush1.bf16.msra.mxu0 %v778
      %827 = vmatprep.subr.bf16.mxu0 0
      %828 = vmatpush1.bf16.msra.mxu0 %v779
      %829 = vmatprep.subr.bf16.mxu0 0
      %830 = vmatpush1.bf16.msra.mxu0 %v780
      %831 = vmatprep.subr.bf16.mxu0 0
      %832 = vmatpush1.bf16.msra.mxu0 %v781
      %833 = vmatprep.subr.bf16.mxu0 0
      %834 = vmatpush1.bf16.msra.mxu0 0
      %835 = vmatprep.subr.bf16.mxu0 0
      %836 = vmatpush1.bf16.msra.mxu0 0
      %837 = vmatprep.subr.bf16.mxu0 0
      %838 = vmatpush1.bf16.msra.mxu0 0
      %839 = vmatprep.subr.bf16.mxu0 0
      %840 = vmatpush1.bf16.msra.mxu0 0
      %841 = vmatprep.subr.bf16.mxu0 0
      %842 = vmatpush1.bf16.msra.mxu0 0
      %843 = vmatprep.subr.bf16.mxu0 0
      %844 = vmatpush1.bf16.msra.mxu0 0
      %845 = vmatprep.subr.bf16.mxu0 0
      %846 = vmatpush1.bf16.msra.mxu0 0
      %847 = vmatprep.mubr.bf16.mxu0 %v792
      %848 = vmatmul.mubr.bf16.gmra.mrb[0].mxu0 %v689
      %v849 = vpop.f32.mrb[0].mxu0
      %v850 = vadd.f32 %v735, %v849
      %v851 = vpop.f32.mrb[0].mxu0
      %v852 = vpop.f32.mrb[0].mxu0
      %v853 = vadd.f32 %v735, %v852
      %v854 = vpop.f32.mrb[0].mxu0
      %855 = vmatprep.mubr.bf16.mxu0 %v795
      %856 = vmatmul.mubr.bf16.gmra.mrb[0].mxu0 %v692
      %v857 = vpop.f32.mrb[0].mxu0
      %v858 = vadd.f32 %v735, %v857
      %v859 = vpop.f32.mrb[0].mxu0
      %v860 = vpop.f32.mrb[0].mxu0
      %v861 = vadd.f32 %v735, %v860
      %v862 = vpop.f32.mrb[0].mxu0
      %863 = vmatprep.mubr.bf16.mxu0 %v798
      %864 = vmatmul.mubr.bf16.gmra.mrb[0].mxu0 %v695
      %v865 = vpop.f32.mrb[0].mxu0
      %v866 = vadd.f32 %v735, %v865
      %v867 = vpop.f32.mrb[0].mxu0
      %v868 = vpop.f32.mrb[0].mxu0
      %v869 = vadd.f32 %v735, %v868
      %v870 = vpop.f32.mrb[0].mxu0
      %871 = vmatprep.mubr.bf16.mxu0 %v801
      %872 = vmatmul.mubr.bf16.gmra.mrb[0].mxu0 %v698
      %v873 = vpop.f32.mrb[0].mxu0
      %v874 = vadd.f32 %v735, %v873
      %v875 = vpop.f32.mrb[0].mxu0
      %v876 = vpop.f32.mrb[0].mxu0
      %v877 = vadd.f32 %v735, %v876
      %v878 = vpop.f32.mrb[0].mxu0
      %879 = vmatprep.mubr.bf16.mxu0 %v804
      %880 = vmatmul.mubr.bf16.gmra.mrb[0].mxu0 %v701
      %v881 = vpop.f32.mrb[0].mxu0
      %v882 = vadd.f32 %v735, %v881
      %v883 = vpop.f32.mrb[0].mxu0
      %v884 = vpop.f32.mrb[0].mxu0
      %v885 = vadd.f32 %v735, %v884
      %v886 = vpop.f32.mrb[0].mxu0
      %887 = vmatprep.mubr.bf16.mxu0 %v807
      %888 = vmatmul.mubr.bf16.gmra.mrb[0].mxu0 %v704
      %v889 = vpop.f32.mrb[0].mxu0
      %v890 = vadd.f32 %v735, %v889
      %v891 = vpop.f32.mrb[0].mxu0
      %v892 = vpop.f32.mrb[0].mxu0
      %v893 = vadd.f32 %v735, %v892
      %v894 = vpop.f32.mrb[0].mxu0
      %895 = vmatprep.mubr.bf16.mxu0 %v810
      %896 = vmatmul.mubr.bf16.gmra.mrb[0].mxu0 %v707
      %v897 = vpop.f32.mrb[0].mxu0
      %v898 = vadd.f32 %v735, %v897
      %v899 = vpop.f32.mrb[0].mxu0
      %v900 = vpop.f32.mrb[0].mxu0
      %v901 = vadd.f32 %v735, %v900
      %v902 = vpop.f32.mrb[0].mxu0
      %903 = vmatprep.mubr.bf16.mxu0 %v813
      %904 = vmatmul.mubr.bf16.gmra.mrb[0].mxu0 %v710
      %v905 = vpop.f32.mrb[0].mxu0
      %v906 = vadd.f32 %v735, %v905
      %v907 = vpop.f32.mrb[0].mxu0
      %v908 = vpop.f32.mrb[0].mxu0
      %v909 = vadd.f32 %v735, %v908
      %v910 = vpop.f32.mrb[0].mxu0
      %911 = vdwg.mxu0
      %v912 = vmax.f32 %v850, 0.0
      %v913 = vmax.f32 %v853, 0.0
      %v914 = vmax.f32 %v858, 0.0
      %v915 = vmax.f32 %v861, 0.0
      %v916 = vmax.f32 %v866, 0.0
      %v917 = vmax.f32 %v869, 0.0
      %v918 = vmax.f32 %v874, 0.0
      %v919 = vmax.f32 %v877, 0.0
      %v920 = vmax.f32 %v882, 0.0
      %v921 = vmax.f32 %v885, 0.0
      %v922 = vmax.f32 %v890, 0.0
      %v923 = vmax.f32 %v893, 0.0
      %v924 = vmax.f32 %v898, 0.0
      %v925 = vmax.f32 %v901, 0.0
      %v926 = vmax.f32 %v906, 0.0
      %v927 = vmax.f32 %v909, 0.0
      %v928 = vpack.c.bf16 %v913, %v912
      %v929 = vpack.c.bf16 %v915, %v914
      %v930 = vpack.c.bf16 %v917, %v916
      %v931 = vpack.c.bf16 %v919, %v918
      %v932 = vpack.c.bf16 %v921, %v920
      %v933 = vpack.c.bf16 %v923, %v922
      %v934 = vpack.c.bf16 %v925, %v924
      %v935 = vpack.c.bf16 %v927, %v926
      %v944 = vunpack.c.l.b16 %v928
      %v945 = vunpack.c.h.b16 %v928
      %v946 = vunpack.c.l.b16 %v929
      %v947 = vunpack.c.h.b16 %v929
      %v948 = vunpack.c.l.b16 %v930
      %v949 = vunpack.c.h.b16 %v930
      %v950 = vunpack.c.l.b16 %v931
      %v951 = vunpack.c.h.b16 %v931
      %v952 = vunpack.c.l.b16 %v932
      %v953 = vunpack.c.h.b16 %v932
      %v954 = vunpack.c.l.b16 %v933
      %v955 = vunpack.c.h.b16 %v933
      %v956 = vunpack.c.l.b16 %v934
      %v957 = vunpack.c.h.b16 %v934
      %v958 = vunpack.c.l.b16 %v935
      %v959 = vunpack.c.h.b16 %v935
      %v960 = vpack.c.b16 %v944, %v944
      %v961 = vpack.c.b16 %v945, %v945
      %v962 = vpack.c.b16 %v946, %v946
      %v963 = vpack.c.b16 %v947, %v947
      %v964 = vpack.c.b16 %v948, %v948
      %v965 = vpack.c.b16 %v949, %v949
      %v966 = vpack.c.b16 %v950, %v950
      %v967 = vpack.c.b16 %v951, %v951
      %v968 = vpack.c.b16 %v952, %v952
      %v969 = vpack.c.b16 %v953, %v953
      %v970 = vpack.c.b16 %v954, %v954
      %v971 = vpack.c.b16 %v955, %v955
      %v972 = vpack.c.b16 %v956, %v956
      %v973 = vpack.c.b16 %v957, %v957
      %v974 = vpack.c.b16 %v958, %v958
      %v975 = vpack.c.b16 %v959, %v959
      %vm992 = vcmask 125952
      %993 = vst.msk [vmem:[%s208] sm:$0xf] %vm992, %v960
      %994 = vst.msk [vmem:[%s208 + $0x4] sm:$0xf] %vm992, %v961
      %995 = vst.msk [vmem:[%s208 + $0x8] sm:$0xf] %vm992, %v962
      %996 = vst.msk [vmem:[%s208 + $0xc] sm:$0xf] %vm992, %v963
      %997 = vst.msk [vmem:[%s208 + $0x10] sm:$0xf] %vm992, %v964
      %998 = vst.msk [vmem:[%s208 + $0x14] sm:$0xf] %vm992, %v965
      %999 = vst.msk [vmem:[%s208 + $0x18] sm:$0xf] %vm992, %v966
      %1000 = vst.msk [vmem:[%s208 + $0x1c] sm:$0xf] %vm992, %v967
      %1001 = vst.msk [vmem:[%s208 + $0x20] sm:$0xf] %vm992, %v968
      %1002 = vst.msk [vmem:[%s208 + $0x24] sm:$0xf] %vm992, %v969
      %1003 = vst.msk [vmem:[%s208 + $0x28] sm:$0xf] %vm992, %v970
      %1004 = vst.msk [vmem:[%s208 + $0x2c] sm:$0xf] %vm992, %v971
      %1005 = vst.msk [vmem:[%s208 + $0x30] sm:$0xf] %vm992, %v972
      %1006 = vst.msk [vmem:[%s208 + $0x34] sm:$0xf] %vm992, %v973
      %1007 = vst.msk [vmem:[%s208 + $0x38] sm:$0xf] %vm992, %v974
      %1008 = vst.msk [vmem:[%s208 + $0x3c] sm:$0xf] %vm992, %v975
      %s1009 = smul.u32 8, %s19
      %p1010 = scmp.lt.s32.totalorder %s18, 1
      %s1011 = scalar_select %p1010, %s18, 1
      %p1012 = scmp.lt.s32.totalorder %s1009, 15
      %s1013 = scalar_select %p1012, %s1009, 15
      %s1014 = smul.addr %s1013, 2
      %s1015 = smul.addr %s1011, 32
      %s1016 = sadd.s32 %s1014, %s1015
      %s1017 = smul.addr %s1016, 4
      %s1018 = scalar_lea.vmem %s3, %s1017
      // Predicated region
      $region33: #{_lambda_.4} parent=31 // pred_check
        %p1019 = pneg %p116
      $region34: #{_lambda_.4} parent=31 // pred_check_branch
        %1021 = sbr.rel (%p1019) target = $region36
      $region35: #{_lambda_.4} parent=31 // pred_region
        %s1022 = smul.u32 8, %s19
      $region36: #{_lambda_.4} parent=31 // pred_fallthru
        _
    $region32: #{_lambda_.4} parent=5 // pred_fallthru
      _
    %p1023 = scmp.le.s32.totalorder 2, %s9
    // Predicated region
    $region37: #{_lambda_.4} parent=5 // pred_check
      %p1024 = pneg %p1023
    $region38: #{_lambda_.4} parent=5 // pred_check_branch
      %1026 = sbr.rel (%p1024) target = $region40
    $region39: #{_lambda_.4} parent=5 // pred_region
      %s1027 = ssub.s32 %s9, 2
      // Predicated region
      $region41: #{_lambda_.4} parent=39 // pred_check
        %p1028 = pneg %p122
      $region42: #{_lambda_.4} parent=39 // pred_check_branch
        %1030 = sbr.rel (%p1028) target = $region44
      $region43: #{_lambda_.4} parent=39 // pred_region
        %s1031 = smul.u32 8, %s21
        %p1032 = scmp.lt.s32.totalorder %s20, 1
        %s1033 = scalar_select %p1032, %s20, 1
        %p1034 = scmp.lt.s32.totalorder %s1031, 15
        %s1035 = scalar_select %p1034, %s1031, 15
        %s1036 = smul.addr %s1035, 2
        %s1037 = smul.addr %s1033, 32
        %s1038 = sadd.s32 %s1036, %s1037
        %s1039 = smul.addr %s1038, 4
        %s1040 = scalar_lea.vmem %s3, %s1039
      $region44: #{_lambda_.4} parent=39 // pred_fallthru
        _
    $region40: #{_lambda_.4} parent=5 // pred_fallthru
      _
  $region6: #{_lambda_.4} parent=0 // loop_footer
    %s13 = sadd.s32 1, %s9
  $region7: #{_lambda_.4} parent=0 // loop_footer_branch
    %8 = sbr.rel target = $region3
  $region8: #{_lambda_.4} parent=0 // loop_exit
    _

</llo_original>
